<compile_context>
chip_gen: v5e
topology: v5e:2x2
jax: 0.10.0
libtpu: 0.0.40
codegen_flags: <defaults>
</compile_context>

<pallas_src>
import math
from functools import partial

import jax
import jax.numpy as jnp
from jax import lax
from jax.experimental import pallas as pl
from jax.experimental.pallas import tpu as pltpu


def _round_up(x, m):
    return (x + m - 1) // m * m


# ----------------------------------------------------------------------------
# __init__ equivalent: build sim_mask from wordvecs (plain JAX, done once).
# TODO(synk): seaborn heatmap / plt.savefig visualization in __init__ has no
# kernel equivalent and is omitted.
# ----------------------------------------------------------------------------
def build_sim_mask(wordvecs, alpha=0.01, beta=0.0):
    w = wordvecs.astype(jnp.float32)
    norms = jnp.linalg.norm(w, axis=-1, keepdims=True)
    wn = w / jnp.maximum(norms, 1e-8)          # torch.cosine_similarity eps
    cos = wn @ wn.T
    sim = 1.0 - cos
    v = w.shape[0]
    sim = jnp.where(jnp.eye(v, dtype=bool), 0.0, sim)
    return sim * alpha + beta                   # (V, V) float32


# ----------------------------------------------------------------------------
# Kernel: logits = logit_scale * (img @ text.T + sim_mask[labels])
#         per_sample = logsumexp(logits) - logits[label]
# ----------------------------------------------------------------------------
def _amce_kernel(labels_smem,          # (B_pad,) int32   scalar-prefetch SMEM
                 img_ref,              # (TB, E_pad)   bf16 VMEM
                 text_ref,             # (TV, E_pad)   bf16 VMEM
                 labels_v_ref,         # (TB, 1)       int32 VMEM
                 scale_ref,            # (1,)          f32  SMEM
                 mask_hbm,             # (V_pad, V_pad) f32 HBM (ANY)
                 loss_ref,             # out: (TB, 1)  f32  VMEM
                 mask_buf,             # scratch (TB, TV) f32
                 sems,                 # scratch DMA sems (TB,)
                 m_acc, s_acc, t_acc,  # scratch (TB, 1) f32
                 *, tb, tv, v_true):
    i = pl.program_id(0)
    j = pl.program_id(1)

    scale = scale_ref[0]               # scalar reads before any DMA wait

    # ---- fused sim_mask row gather: TB small DMAs HBM -> VMEM -------------
    col0 = pl.multiple_of(j * tv, tv)
    copies = []
    for r in range(tb):
        lbl = labels_smem[i * tb + r]
        cp = pltpu.make_async_copy(
            mask_hbm.at[pl.ds(lbl, 1), pl.ds(col0, tv)],
            mask_buf.at[pl.ds(r, 1), :],
            sems.at[r])
        cp.start()
        copies.append(cp)

    # ---- init online-logsumexp accumulators on the first vocab tile -------
    @pl.when(j == 0)
    def _():
        m_acc[...] = jnp.full_like(m_acc, -1e30)
        s_acc[...] = jnp.zeros_like(s_acc)
        t_acc[...] = jnp.zeros_like(t_acc)

    # ---- MXU: (TB, E) x (TV, E) contracted on E, f32 accumulation ---------
    logits = lax.dot_general(
        img_ref[...], text_ref[...],
        dimension_numbers=(((1,), (1,)), ((), ())),
        preferred_element_type=jnp.float32)                     # (TB, TV) f32

    # ---- add gathered adaptive margin, apply logit scale (all f32) --------
    for cp in copies:
        cp.wait()
    logits = (logits + mask_buf[...]) * scale

    # mask vocab padding columns
    col_ids = lax.broadcasted_iota(jnp.int32, (tb, tv), 1) + j * tv
    logits = jnp.where(col_ids < v_true, logits, -1e30)

    # ---- online logsumexp update -------------------------------------------
    m_prev = m_acc[...]
    m_new = jnp.maximum(m_prev, jnp.max(logits, axis=-1, keepdims=True))
    corr = jnp.exp(m_prev - m_new)
    p = jnp.exp(logits - m_new)
    s_acc[...] = corr * s_acc[...] + jnp.sum(p, axis=-1, keepdims=True)
    m_acc[...] = m_new

    # target logit (replaces dense one-hot) — lives in exactly one vocab tile
    is_tgt = col_ids == labels_v_ref[...]                       # (TB, TV)
    t_acc[...] += jnp.sum(jnp.where(is_tgt, logits, 0.0), axis=-1,
                          keepdims=True)

    # ---- finalize: per-sample loss = logsumexp - target logit -------------
    @pl.when(j == pl.num_programs(1) - 1)
    def _():
        lse = m_acc[...] + jnp.log(s_acc[...])
        loss_ref[...] = lse - t_acc[...]


def adaptive_margin_cross_entropy_loss(img_feats_norm, text_feats_norm,
                                       logit_scale, labels, sim_mask,
                                       *, tb=16, tv=128):
    B, E = img_feats_norm.shape
    V = text_feats_norm.shape[0]

    B_pad = _round_up(B, tb)
    V_pad = _round_up(V, tv)
    E_pad = _round_up(E, 128)

    # bf16 matmul operands (MXU bf16 rate); pads are zeros (contribute 0).
    img_p = jnp.zeros((B_pad, E_pad), jnp.bfloat16).at[:B, :E].set(
        img_feats_norm.astype(jnp.bfloat16))
    txt_p = jnp.zeros((V_pad, E_pad), jnp.bfloat16).at[:V, :E].set(
        text_feats_norm.astype(jnp.bfloat16))
    mask_p = jnp.zeros((V_pad, V_pad), jnp.float32).at[:V, :V].set(
        sim_mask.astype(jnp.float32))
    labels_p = jnp.zeros((B_pad,), jnp.int32).at[:B].set(
        labels.astype(jnp.int32))
    labels_col = labels_p.reshape(B_pad, 1)
    scale = jnp.asarray(logit_scale, jnp.float32).reshape(1)

    n_b = B_pad // tb
    n_v = V_pad // tv

    grid_spec = pltpu.PrefetchScalarGridSpec(
        num_scalar_prefetch=1,                                    # labels
        grid=(n_b, n_v),
        in_specs=[
            pl.BlockSpec((tb, E_pad), lambda i, j, lbl: (i, 0)),  # img
            pl.BlockSpec((tv, E_pad), lambda i, j, lbl: (j, 0)),  # text (V,E)
            pl.BlockSpec((tb, 1),     lambda i, j, lbl: (i, 0)),  # labels col
            pl.BlockSpec(memory_space=pltpu.MemorySpace.SMEM),    # scale
            pl.BlockSpec(memory_space=pl.ANY),                    # sim_mask HBM
        ],
        out_specs=pl.BlockSpec((tb, 1), lambda i, j, lbl: (i, 0)),
        scratch_shapes=[
            pltpu.VMEM((tb, tv), jnp.float32),                    # mask rows
            pltpu.SemaphoreType.DMA((tb,)),
            pltpu.VMEM((tb, 1), jnp.float32),                     # running max
            pltpu.VMEM((tb, 1), jnp.float32),                     # running sum
            pltpu.VMEM((tb, 1), jnp.float32),                     # target logit
        ],
    )

    flops = 2 * B_pad * V_pad * E_pad
    bytes_accessed = (img_p.size * 2 + n_b * txt_p.size * 2
                      + B_pad * V_pad * 4 + B_pad * 4 * 2 + B_pad * 4)

    per_sample = pl.pallas_call(
        partial(_amce_kernel, tb=tb, tv=tv, v_true=V),
        grid_spec=grid_spec,
        out_shape=jax.ShapeDtypeStruct((B_pad, 1), jnp.float32),
        compiler_params=pltpu.CompilerParams(
            dimension_semantics=("parallel", "arbitrary")),
        cost_estimate=pl.CostEstimate(
            flops=flops, transcendentals=B_pad * V_pad,
            bytes_accessed=bytes_accessed),
    )(labels_p, img_p, txt_p, labels_col, scale, mask_p)

    # mean over the true batch only (excludes padded rows)
    return jnp.mean(per_sample[:B, 0])


if __name__ == "__main__":
    key = jax.random.PRNGKey(0)
    k1, k2, k3, k4 = jax.random.split(key, 4)

    # batch, embed dim, num classes, wordvec dim — small but exercises both
    # batch padding (24 -> 32) and vocab tiling/padding (200 -> 2 x 128).
    B, E, V, Dw = 24, 32, 200, 24

    wordvecs = jax.random.normal(k1, (V, Dw), jnp.float32)
    sim_mask = build_sim_mask(wordvecs, alpha=0.01, beta=0.0)

    img = jax.random.normal(k2, (B, E), jnp.float32)
    img = img / jnp.linalg.norm(img, axis=-1, keepdims=True)
    txt = jax.random.normal(k3, (V, E), jnp.float32)
    txt = txt / jnp.linalg.norm(txt, axis=-1, keepdims=True)
    labels = jax.random.randint(k4, (B,), 0, V)
    logit_scale = jnp.float32(math.exp(math.log(1.0 / 0.07)))  # CLIP init

    loss = adaptive_margin_cross_entropy_loss(img, txt, logit_scale, labels,
                                              sim_mask)
    jax.block_until_ready(loss)

    # Pure-JAX reference with the same bf16-rounded matmul operands.
    img_r = img.astype(jnp.bfloat16).astype(jnp.float32)
    txt_r = txt.astype(jnp.bfloat16).astype(jnp.float32)
    logits_ref = (img_r @ txt_r.T + sim_mask[labels]) * logit_scale
    ref = jnp.mean(jax.nn.logsumexp(logits_ref, axis=-1)
                   - jnp.take_along_axis(logits_ref, labels[:, None], 1)[:, 0])
    assert jnp.allclose(loss, ref, rtol=5e-3, atol=5e-3), (loss, ref)

    print("KERNEL_OK")
</pallas_src>

<mosaic_0001>
module attributes {stable_mosaic.version = 11 : i64} {
  func.func @_amce_kernel(%arg0: i32, %arg1: i32, %arg2: memref<32xi32, #tpu.memory_space<smem>>, %arg3: memref<16x128xbf16, #tpu.memory_space<vmem>>, %arg4: memref<128x128xbf16, #tpu.memory_space<vmem>>, %arg5: memref<16x1xi32, #tpu.memory_space<vmem>>, %arg6: memref<1xf32, #tpu.memory_space<smem>>, %arg7: memref<256x256xf32, #tpu.memory_space<any>>, %arg8: memref<16x1xf32, #tpu.memory_space<vmem>>, %arg9: memref<16x128xf32, #tpu.memory_space<vmem>>, %arg10: memref<16x!tpu.dma_semaphore, #tpu.memory_space<semaphore_mem>>, %arg11: memref<16x1xf32, #tpu.memory_space<vmem>>, %arg12: memref<16x1xf32, #tpu.memory_space<vmem>>, %arg13: memref<16x1xf32, #tpu.memory_space<vmem>>) attributes {dimension_semantics = [#tpu.dimension_semantics<parallel>, #tpu.dimension_semantics<arbitrary>], iteration_bounds = array<i64: 2, 2>, scalar_prefetch = 1 : i64, scratch_operands = 5 : i64, tpu.core_type = #tpu.core_type<tc>, window_params = [{transform_indices = @transform_0, window_bounds = array<i64: 16, 128>}, {transform_indices = @transform_1, window_bounds = array<i64: 128, 128>}, {transform_indices = @transform_2, window_bounds = array<i64: 16, 1>}, {transform_indices = @transform_3, window_bounds = array<i64: 1>}, {}, {transform_indices = @transform_5, window_bounds = array<i64: 16, 1>}]} {
    %c0 = arith.constant 0 : index
    %0 = memref.load %arg6[%c0] : memref<1xf32, #tpu.memory_space<smem>>
    %c128_i32 = arith.constant 128 : i32
    %1 = arith.muli %arg1, %c128_i32 : i32
    %2 = tpu.assume_multiple %1, 128 : i32
    %c16_i32 = arith.constant 16 : i32
    %3 = arith.muli %arg0, %c16_i32 : i32
    %c0_i32 = arith.constant 0 : i32
    %4 = arith.addi %3, %c0_i32 : i32
    %5 = arith.index_cast %4 : i32 to index
    %6 = memref.load %arg2[%5] : memref<32xi32, #tpu.memory_space<smem>>
    %c0_i32_0 = arith.constant 0 : i32
    %7 = tpu.memref_slice %arg7[%6, %2] : memref<256x256xf32, #tpu.memory_space<any>> -> memref<1x128xf32, #tpu.memory_space<any>>
    %c0_i32_1 = arith.constant 0 : i32
    %c0_i32_2 = arith.constant 0 : i32
    %8 = tpu.memref_slice %arg9[%c0_i32_1, %c0_i32_2] : memref<16x128xf32, #tpu.memory_space<vmem>> -> memref<1x128xf32, #tpu.memory_space<vmem>>
    %9 = tpu.memref_slice %arg10[%c0_i32_0] : memref<16x!tpu.dma_semaphore, #tpu.memory_space<semaphore_mem>> -> memref<1x!tpu.dma_semaphore, #tpu.memory_space<semaphore_mem>>
    %10 = tpu.memref_squeeze %9 : memref<1x!tpu.dma_semaphore, #tpu.memory_space<semaphore_mem>> -> memref<!tpu.dma_semaphore, #tpu.memory_space<semaphore_mem>>
    tpu.enqueue_dma source(%7 : memref<1x128xf32, #tpu.memory_space<any>>) target(%8 : memref<1x128xf32, #tpu.memory_space<vmem>>) target_semaphore(%10 : memref<!tpu.dma_semaphore, #tpu.memory_space<semaphore_mem>>)
    %c16_i32_3 = arith.constant 16 : i32
    %11 = arith.muli %arg0, %c16_i32_3 : i32
    %c1_i32 = arith.constant 1 : i32
    %12 = arith.addi %11, %c1_i32 : i32
    %13 = arith.index_cast %12 : i32 to index
    %14 = memref.load %arg2[%13] : memref<32xi32, #tpu.memory_space<smem>>
    %c1_i32_4 = arith.constant 1 : i32
    %15 = tpu.memref_slice %arg7[%14, %2] : memref<256x256xf32, #tpu.memory_space<any>> -> memref<1x128xf32, #tpu.memory_space<any>>
    %c1_i32_5 = arith.constant 1 : i32
    %c0_i32_6 = arith.constant 0 : i32
    %16 = tpu.memref_slice %arg9[%c1_i32_5, %c0_i32_6] : memref<16x128xf32, #tpu.memory_space<vmem>> -> memref<1x128xf32, #tpu.memory_space<vmem>>
    %17 = tpu.memref_slice %arg10[%c1_i32_4] : memref<16x!tpu.dma_semaphore, #tpu.memory_space<semaphore_mem>> -> memref<1x!tpu.dma_semaphore, #tpu.memory_space<semaphore_mem>>
    %18 = tpu.memref_squeeze %17 : memref<1x!tpu.dma_semaphore, #tpu.memory_space<semaphore_mem>> -> memref<!tpu.dma_semaphore, #tpu.memory_space<semaphore_mem>>
    tpu.enqueue_dma source(%15 : memref<1x128xf32, #tpu.memory_space<any>>) target(%16 : memref<1x128xf32, #tpu.memory_space<vmem>>) target_semaphore(%18 : memref<!tpu.dma_semaphore, #tpu.memory_space<semaphore_mem>>)
    %c16_i32_7 = arith.constant 16 : i32
    %19 = arith.muli %arg0, %c16_i32_7 : i32
    %c2_i32 = arith.constant 2 : i32
    %20 = arith.addi %19, %c2_i32 : i32
    %21 = arith.index_cast %20 : i32 to index
    %22 = memref.load %arg2[%21] : memref<32xi32, #tpu.memory_space<smem>>
    %c2_i32_8 = arith.constant 2 : i32
    %23 = tpu.memref_slice %arg7[%22, %2] : memref<256x256xf32, #tpu.memory_space<any>> -> memref<1x128xf32, #tpu.memory_space<any>>
    %c2_i32_9 = arith.constant 2 : i32
    %c0_i32_10 = arith.constant 0 : i32
    %24 = tpu.memref_slice %arg9[%c2_i32_9, %c0_i32_10] : memref<16x128xf32, #tpu.memory_space<vmem>> -> memref<1x128xf32, #tpu.memory_space<vmem>>
    %25 = tpu.memref_slice %arg10[%c2_i32_8] : memref<16x!tpu.dma_semaphore, #tpu.memory_space<semaphore_mem>> -> memref<1x!tpu.dma_semaphore, #tpu.memory_space<semaphore_mem>>
    %26 = tpu.memref_squeeze %25 : memref<1x!tpu.dma_semaphore, #tpu.memory_space<semaphore_mem>> -> memref<!tpu.dma_semaphore, #tpu.memory_space<semaphore_mem>>
    tpu.enqueue_dma source(%23 : memref<1x128xf32, #tpu.memory_space<any>>) target(%24 : memref<1x128xf32, #tpu.memory_space<vmem>>) target_semaphore(%26 : memref<!tpu.dma_semaphore, #tpu.memory_space<semaphore_mem>>)
    %c16_i32_11 = arith.constant 16 : i32
    %27 = arith.muli %arg0, %c16_i32_11 : i32
    %c3_i32 = arith.constant 3 : i32
    %28 = arith.addi %27, %c3_i32 : i32
    %29 = arith.index_cast %28 : i32 to index
    %30 = memref.load %arg2[%29] : memref<32xi32, #tpu.memory_space<smem>>
    %c3_i32_12 = arith.constant 3 : i32
    %31 = tpu.memref_slice %arg7[%30, %2] : memref<256x256xf32, #tpu.memory_space<any>> -> memref<1x128xf32, #tpu.memory_space<any>>
    %c3_i32_13 = arith.constant 3 : i32
    %c0_i32_14 = arith.constant 0 : i32
    %32 = tpu.memref_slice %arg9[%c3_i32_13, %c0_i32_14] : memref<16x128xf32, #tpu.memory_space<vmem>> -> memref<1x128xf32, #tpu.memory_space<vmem>>
    %33 = tpu.memref_slice %arg10[%c3_i32_12] : memref<16x!tpu.dma_semaphore, #tpu.memory_space<semaphore_mem>> -> memref<1x!tpu.dma_semaphore, #tpu.memory_space<semaphore_mem>>
    %34 = tpu.memref_squeeze %33 : memref<1x!tpu.dma_semaphore, #tpu.memory_space<semaphore_mem>> -> memref<!tpu.dma_semaphore, #tpu.memory_space<semaphore_mem>>
    tpu.enqueue_dma source(%31 : memref<1x128xf32, #tpu.memory_space<any>>) target(%32 : memref<1x128xf32, #tpu.memory_space<vmem>>) target_semaphore(%34 : memref<!tpu.dma_semaphore, #tpu.memory_space<semaphore_mem>>)
    %c16_i32_15 = arith.constant 16 : i32
    %35 = arith.muli %arg0, %c16_i32_15 : i32
    %c4_i32 = arith.constant 4 : i32
    %36 = arith.addi %35, %c4_i32 : i32
    %37 = arith.index_cast %36 : i32 to index
    %38 = memref.load %arg2[%37] : memref<32xi32, #tpu.memory_space<smem>>
    %c4_i32_16 = arith.constant 4 : i32
    %39 = tpu.memref_slice %arg7[%38, %2] : memref<256x256xf32, #tpu.memory_space<any>> -> memref<1x128xf32, #tpu.memory_space<any>>
    %c4_i32_17 = arith.constant 4 : i32
    %c0_i32_18 = arith.constant 0 : i32
    %40 = tpu.memref_slice %arg9[%c4_i32_17, %c0_i32_18] : memref<16x128xf32, #tpu.memory_space<vmem>> -> memref<1x128xf32, #tpu.memory_space<vmem>>
    %41 = tpu.memref_slice %arg10[%c4_i32_16] : memref<16x!tpu.dma_semaphore, #tpu.memory_space<semaphore_mem>> -> memref<1x!tpu.dma_semaphore, #tpu.memory_space<semaphore_mem>>
    %42 = tpu.memref_squeeze %41 : memref<1x!tpu.dma_semaphore, #tpu.memory_space<semaphore_mem>> -> memref<!tpu.dma_semaphore, #tpu.memory_space<semaphore_mem>>
    tpu.enqueue_dma source(%39 : memref<1x128xf32, #tpu.memory_space<any>>) target(%40 : memref<1x128xf32, #tpu.memory_space<vmem>>) target_semaphore(%42 : memref<!tpu.dma_semaphore, #tpu.memory_space<semaphore_mem>>)
    %c16_i32_19 = arith.constant 16 : i32
    %43 = arith.muli %arg0, %c16_i32_19 : i32
    %c5_i32 = arith.constant 5 : i32
    %44 = arith.addi %43, %c5_i32 : i32
    %45 = arith.index_cast %44 : i32 to index
    %46 = memref.load %arg2[%45] : memref<32xi32, #tpu.memory_space<smem>>
    %c5_i32_20 = arith.constant 5 : i32
    %47 = tpu.memref_slice %arg7[%46, %2] : memref<256x256xf32, #tpu.memory_space<any>> -> memref<1x128xf32, #tpu.memory_space<any>>
    %c5_i32_21 = arith.constant 5 : i32
    %c0_i32_22 = arith.constant 0 : i32
    %48 = tpu.memref_slice %arg9[%c5_i32_21, %c0_i32_22] : memref<16x128xf32, #tpu.memory_space<vmem>> -> memref<1x128xf32, #tpu.memory_space<vmem>>
    %49 = tpu.memref_slice %arg10[%c5_i32_20] : memref<16x!tpu.dma_semaphore, #tpu.memory_space<semaphore_mem>> -> memref<1x!tpu.dma_semaphore, #tpu.memory_space<semaphore_mem>>
    %50 = tpu.memref_squeeze %49 : memref<1x!tpu.dma_semaphore, #tpu.memory_space<semaphore_mem>> -> memref<!tpu.dma_semaphore, #tpu.memory_space<semaphore_mem>>
    tpu.enqueue_dma source(%47 : memref<1x128xf32, #tpu.memory_space<any>>) target(%48 : memref<1x128xf32, #tpu.memory_space<vmem>>) target_semaphore(%50 : memref<!tpu.dma_semaphore, #tpu.memory_space<semaphore_mem>>)
    %c16_i32_23 = arith.constant 16 : i32
    %51 = arith.muli %arg0, %c16_i32_23 : i32
    %c6_i32 = arith.constant 6 : i32
    %52 = arith.addi %51, %c6_i32 : i32
    %53 = arith.index_cast %52 : i32 to index
    %54 = memref.load %arg2[%53] : memref<32xi32, #tpu.memory_space<smem>>
    %c6_i32_24 = arith.constant 6 : i32
    %55 = tpu.memref_slice %arg7[%54, %2] : memref<256x256xf32, #tpu.memory_space<any>> -> memref<1x128xf32, #tpu.memory_space<any>>
    %c6_i32_25 = arith.constant 6 : i32
    %c0_i32_26 = arith.constant 0 : i32
    %56 = tpu.memref_slice %arg9[%c6_i32_25, %c0_i32_26] : memref<16x128xf32, #tpu.memory_space<vmem>> -> memref<1x128xf32, #tpu.memory_space<vmem>>
    %57 = tpu.memref_slice %arg10[%c6_i32_24] : memref<16x!tpu.dma_semaphore, #tpu.memory_space<semaphore_mem>> -> memref<1x!tpu.dma_semaphore, #tpu.memory_space<semaphore_mem>>
    %58 = tpu.memref_squeeze %57 : memref<1x!tpu.dma_semaphore, #tpu.memory_space<semaphore_mem>> -> memref<!tpu.dma_semaphore, #tpu.memory_space<semaphore_mem>>
    tpu.enqueue_dma source(%55 : memref<1x128xf32, #tpu.memory_space<any>>) target(%56 : memref<1x128xf32, #tpu.memory_space<vmem>>) target_semaphore(%58 : memref<!tpu.dma_semaphore, #tpu.memory_space<semaphore_mem>>)
    %c16_i32_27 = arith.constant 16 : i32
    %59 = arith.muli %arg0, %c16_i32_27 : i32
    %c7_i32 = arith.constant 7 : i32
    %60 = arith.addi %59, %c7_i32 : i32
    %61 = arith.index_cast %60 : i32 to index
    %62 = memref.load %arg2[%61] : memref<32xi32, #tpu.memory_space<smem>>
    %c7_i32_28 = arith.constant 7 : i32
    %63 = tpu.memref_slice %arg7[%62, %2] : memref<256x256xf32, #tpu.memory_space<any>> -> memref<1x128xf32, #tpu.memory_space<any>>
    %c7_i32_29 = arith.constant 7 : i32
    %c0_i32_30 = arith.constant 0 : i32
    %64 = tpu.memref_slice %arg9[%c7_i32_29, %c0_i32_30] : memref<16x128xf32, #tpu.memory_space<vmem>> -> memref<1x128xf32, #tpu.memory_space<vmem>>
    %65 = tpu.memref_slice %arg10[%c7_i32_28] : memref<16x!tpu.dma_semaphore, #tpu.memory_space<semaphore_mem>> -> memref<1x!tpu.dma_semaphore, #tpu.memory_space<semaphore_mem>>
    %66 = tpu.memref_squeeze %65 : memref<1x!tpu.dma_semaphore, #tpu.memory_space<semaphore_mem>> -> memref<!tpu.dma_semaphore, #tpu.memory_space<semaphore_mem>>
    tpu.enqueue_dma source(%63 : memref<1x128xf32, #tpu.memory_space<any>>) target(%64 : memref<1x128xf32, #tpu.memory_space<vmem>>) target_semaphore(%66 : memref<!tpu.dma_semaphore, #tpu.memory_space<semaphore_mem>>)
    %c16_i32_31 = arith.constant 16 : i32
    %67 = arith.muli %arg0, %c16_i32_31 : i32
    %c8_i32 = arith.constant 8 : i32
    %68 = arith.addi %67, %c8_i32 : i32
    %69 = arith.index_cast %68 : i32 to index
    %70 = memref.load %arg2[%69] : memref<32xi32, #tpu.memory_space<smem>>
    %c8_i32_32 = arith.constant 8 : i32
    %71 = tpu.memref_slice %arg7[%70, %2] : memref<256x256xf32, #tpu.memory_space<any>> -> memref<1x128xf32, #tpu.memory_space<any>>
    %c8_i32_33 = arith.constant 8 : i32
    %c0_i32_34 = arith.constant 0 : i32
    %72 = tpu.memref_slice %arg9[%c8_i32_33, %c0_i32_34] : memref<16x128xf32, #tpu.memory_space<vmem>> -> memref<1x128xf32, #tpu.memory_space<vmem>>
    %73 = tpu.memref_slice %arg10[%c8_i32_32] : memref<16x!tpu.dma_semaphore, #tpu.memory_space<semaphore_mem>> -> memref<1x!tpu.dma_semaphore, #tpu.memory_space<semaphore_mem>>
    %74 = tpu.memref_squeeze %73 : memref<1x!tpu.dma_semaphore, #tpu.memory_space<semaphore_mem>> -> memref<!tpu.dma_semaphore, #tpu.memory_space<semaphore_mem>>
    tpu.enqueue_dma source(%71 : memref<1x128xf32, #tpu.memory_space<any>>) target(%72 : memref<1x128xf32, #tpu.memory_space<vmem>>) target_semaphore(%74 : memref<!tpu.dma_semaphore, #tpu.memory_space<semaphore_mem>>)
    %c16_i32_35 = arith.constant 16 : i32
    %75 = arith.muli %arg0, %c16_i32_35 : i32
    %c9_i32 = arith.constant 9 : i32
    %76 = arith.addi %75, %c9_i32 : i32
    %77 = arith.index_cast %76 : i32 to index
    %78 = memref.load %arg2[%77] : memref<32xi32, #tpu.memory_space<smem>>
    %c9_i32_36 = arith.constant 9 : i32
    %79 = tpu.memref_slice %arg7[%78, %2] : memref<256x256xf32, #tpu.memory_space<any>> -> memref<1x128xf32, #tpu.memory_space<any>>
    %c9_i32_37 = arith.constant 9 : i32
    %c0_i32_38 = arith.constant 0 : i32
    %80 = tpu.memref_slice %arg9[%c9_i32_37, %c0_i32_38] : memref<16x128xf32, #tpu.memory_space<vmem>> -> memref<1x128xf32, #tpu.memory_space<vmem>>
    %81 = tpu.memref_slice %arg10[%c9_i32_36] : memref<16x!tpu.dma_semaphore, #tpu.memory_space<semaphore_mem>> -> memref<1x!tpu.dma_semaphore, #tpu.memory_space<semaphore_mem>>
    %82 = tpu.memref_squeeze %81 : memref<1x!tpu.dma_semaphore, #tpu.memory_space<semaphore_mem>> -> memref<!tpu.dma_semaphore, #tpu.memory_space<semaphore_mem>>
    tpu.enqueue_dma source(%79 : memref<1x128xf32, #tpu.memory_space<any>>) target(%80 : memref<1x128xf32, #tpu.memory_space<vmem>>) target_semaphore(%82 : memref<!tpu.dma_semaphore, #tpu.memory_space<semaphore_mem>>)
    %c16_i32_39 = arith.constant 16 : i32
    %83 = arith.muli %arg0, %c16_i32_39 : i32
    %c10_i32 = arith.constant 10 : i32
    %84 = arith.addi %83, %c10_i32 : i32
    %85 = arith.index_cast %84 : i32 to index
    %86 = memref.load %arg2[%85] : memref<32xi32, #tpu.memory_space<smem>>
    %c10_i32_40 = arith.constant 10 : i32
    %87 = tpu.memref_slice %arg7[%86, %2] : memref<256x256xf32, #tpu.memory_space<any>> -> memref<1x128xf32, #tpu.memory_space<any>>
    %c10_i32_41 = arith.constant 10 : i32
    %c0_i32_42 = arith.constant 0 : i32
    %88 = tpu.memref_slice %arg9[%c10_i32_41, %c0_i32_42] : memref<16x128xf32, #tpu.memory_space<vmem>> -> memref<1x128xf32, #tpu.memory_space<vmem>>
    %89 = tpu.memref_slice %arg10[%c10_i32_40] : memref<16x!tpu.dma_semaphore, #tpu.memory_space<semaphore_mem>> -> memref<1x!tpu.dma_semaphore, #tpu.memory_space<semaphore_mem>>
    %90 = tpu.memref_squeeze %89 : memref<1x!tpu.dma_semaphore, #tpu.memory_space<semaphore_mem>> -> memref<!tpu.dma_semaphore, #tpu.memory_space<semaphore_mem>>
    tpu.enqueue_dma source(%87 : memref<1x128xf32, #tpu.memory_space<any>>) target(%88 : memref<1x128xf32, #tpu.memory_space<vmem>>) target_semaphore(%90 : memref<!tpu.dma_semaphore, #tpu.memory_space<semaphore_mem>>)
    %c16_i32_43 = arith.constant 16 : i32
    %91 = arith.muli %arg0, %c16_i32_43 : i32
    %c11_i32 = arith.constant 11 : i32
    %92 = arith.addi %91, %c11_i32 : i32
    %93 = arith.index_cast %92 : i32 to index
    %94 = memref.load %arg2[%93] : memref<32xi32, #tpu.memory_space<smem>>
    %c11_i32_44 = arith.constant 11 : i32
    %95 = tpu.memref_slice %arg7[%94, %2] : memref<256x256xf32, #tpu.memory_space<any>> -> memref<1x128xf32, #tpu.memory_space<any>>
    %c11_i32_45 = arith.constant 11 : i32
    %c0_i32_46 = arith.constant 0 : i32
    %96 = tpu.memref_slice %arg9[%c11_i32_45, %c0_i32_46] : memref<16x128xf32, #tpu.memory_space<vmem>> -> memref<1x128xf32, #tpu.memory_space<vmem>>
    %97 = tpu.memref_slice %arg10[%c11_i32_44] : memref<16x!tpu.dma_semaphore, #tpu.memory_space<semaphore_mem>> -> memref<1x!tpu.dma_semaphore, #tpu.memory_space<semaphore_mem>>
    %98 = tpu.memref_squeeze %97 : memref<1x!tpu.dma_semaphore, #tpu.memory_space<semaphore_mem>> -> memref<!tpu.dma_semaphore, #tpu.memory_space<semaphore_mem>>
    tpu.enqueue_dma source(%95 : memref<1x128xf32, #tpu.memory_space<any>>) target(%96 : memref<1x128xf32, #tpu.memory_space<vmem>>) target_semaphore(%98 : memref<!tpu.dma_semaphore, #tpu.memory_space<semaphore_mem>>)
    %c16_i32_47 = arith.constant 16 : i32
    %99 = arith.muli %arg0, %c16_i32_47 : i32
    %c12_i32 = arith.constant 12 : i32
    %100 = arith.addi %99, %c12_i32 : i32
    %101 = arith.index_cast %100 : i32 to index
    %102 = memref.load %arg2[%101] : memref<32xi32, #tpu.memory_space<smem>>
    %c12_i32_48 = arith.constant 12 : i32
    %103 = tpu.memref_slice %arg7[%102, %2] : memref<256x256xf32, #tpu.memory_space<any>> -> memref<1x128xf32, #tpu.memory_space<any>>
    %c12_i32_49 = arith.constant 12 : i32
    %c0_i32_50 = arith.constant 0 : i32
    %104 = tpu.memref_slice %arg9[%c12_i32_49, %c0_i32_50] : memref<16x128xf32, #tpu.memory_space<vmem>> -> memref<1x128xf32, #tpu.memory_space<vmem>>
    %105 = tpu.memref_slice %arg10[%c12_i32_48] : memref<16x!tpu.dma_semaphore, #tpu.memory_space<semaphore_mem>> -> memref<1x!tpu.dma_semaphore, #tpu.memory_space<semaphore_mem>>
    %106 = tpu.memref_squeeze %105 : memref<1x!tpu.dma_semaphore, #tpu.memory_space<semaphore_mem>> -> memref<!tpu.dma_semaphore, #tpu.memory_space<semaphore_mem>>
    tpu.enqueue_dma source(%103 : memref<1x128xf32, #tpu.memory_space<any>>) target(%104 : memref<1x128xf32, #tpu.memory_space<vmem>>) target_semaphore(%106 : memref<!tpu.dma_semaphore, #tpu.memory_space<semaphore_mem>>)
    %c16_i32_51 = arith.constant 16 : i32
    %107 = arith.muli %arg0, %c16_i32_51 : i32
    %c13_i32 = arith.constant 13 : i32
    %108 = arith.addi %107, %c13_i32 : i32
    %109 = arith.index_cast %108 : i32 to index
    %110 = memref.load %arg2[%109] : memref<32xi32, #tpu.memory_space<smem>>
    %c13_i32_52 = arith.constant 13 : i32
    %111 = tpu.memref_slice %arg7[%110, %2] : memref<256x256xf32, #tpu.memory_space<any>> -> memref<1x128xf32, #tpu.memory_space<any>>
    %c13_i32_53 = arith.constant 13 : i32
    %c0_i32_54 = arith.constant 0 : i32
    %112 = tpu.memref_slice %arg9[%c13_i32_53, %c0_i32_54] : memref<16x128xf32, #tpu.memory_space<vmem>> -> memref<1x128xf32, #tpu.memory_space<vmem>>
    %113 = tpu.memref_slice %arg10[%c13_i32_52] : memref<16x!tpu.dma_semaphore, #tpu.memory_space<semaphore_mem>> -> memref<1x!tpu.dma_semaphore, #tpu.memory_space<semaphore_mem>>
    %114 = tpu.memref_squeeze %113 : memref<1x!tpu.dma_semaphore, #tpu.memory_space<semaphore_mem>> -> memref<!tpu.dma_semaphore, #tpu.memory_space<semaphore_mem>>
    tpu.enqueue_dma source(%111 : memref<1x128xf32, #tpu.memory_space<any>>) target(%112 : memref<1x128xf32, #tpu.memory_space<vmem>>) target_semaphore(%114 : memref<!tpu.dma_semaphore, #tpu.memory_space<semaphore_mem>>)
    %c16_i32_55 = arith.constant 16 : i32
    %115 = arith.muli %arg0, %c16_i32_55 : i32
    %c14_i32 = arith.constant 14 : i32
    %116 = arith.addi %115, %c14_i32 : i32
    %117 = arith.index_cast %116 : i32 to index
    %118 = memref.load %arg2[%117] : memref<32xi32, #tpu.memory_space<smem>>
    %c14_i32_56 = arith.constant 14 : i32
    %119 = tpu.memref_slice %arg7[%118, %2] : memref<256x256xf32, #tpu.memory_space<any>> -> memref<1x128xf32, #tpu.memory_space<any>>
    %c14_i32_57 = arith.constant 14 : i32
    %c0_i32_58 = arith.constant 0 : i32
    %120 = tpu.memref_slice %arg9[%c14_i32_57, %c0_i32_58] : memref<16x128xf32, #tpu.memory_space<vmem>> -> memref<1x128xf32, #tpu.memory_space<vmem>>
    %121 = tpu.memref_slice %arg10[%c14_i32_56] : memref<16x!tpu.dma_semaphore, #tpu.memory_space<semaphore_mem>> -> memref<1x!tpu.dma_semaphore, #tpu.memory_space<semaphore_mem>>
    %122 = tpu.memref_squeeze %121 : memref<1x!tpu.dma_semaphore, #tpu.memory_space<semaphore_mem>> -> memref<!tpu.dma_semaphore, #tpu.memory_space<semaphore_mem>>
    tpu.enqueue_dma source(%119 : memref<1x128xf32, #tpu.memory_space<any>>) target(%120 : memref<1x128xf32, #tpu.memory_space<vmem>>) target_semaphore(%122 : memref<!tpu.dma_semaphore, #tpu.memory_space<semaphore_mem>>)
    %c16_i32_59 = arith.constant 16 : i32
    %123 = arith.muli %arg0, %c16_i32_59 : i32
    %c15_i32 = arith.constant 15 : i32
    %124 = arith.addi %123, %c15_i32 : i32
    %125 = arith.index_cast %124 : i32 to index
    %126 = memref.load %arg2[%125] : memref<32xi32, #tpu.memory_space<smem>>
    %c15_i32_60 = arith.constant 15 : i32
    %127 = tpu.memref_slice %arg7[%126, %2] : memref<256x256xf32, #tpu.memory_space<any>> -> memref<1x128xf32, #tpu.memory_space<any>>
    %c15_i32_61 = arith.constant 15 : i32
    %c0_i32_62 = arith.constant 0 : i32
    %128 = tpu.memref_slice %arg9[%c15_i32_61, %c0_i32_62] : memref<16x128xf32, #tpu.memory_space<vmem>> -> memref<1x128xf32, #tpu.memory_space<vmem>>
    %129 = tpu.memref_slice %arg10[%c15_i32_60] : memref<16x!tpu.dma_semaphore, #tpu.memory_space<semaphore_mem>> -> memref<1x!tpu.dma_semaphore, #tpu.memory_space<semaphore_mem>>
    %130 = tpu.memref_squeeze %129 : memref<1x!tpu.dma_semaphore, #tpu.memory_space<semaphore_mem>> -> memref<!tpu.dma_semaphore, #tpu.memory_space<semaphore_mem>>
    tpu.enqueue_dma source(%127 : memref<1x128xf32, #tpu.memory_space<any>>) target(%128 : memref<1x128xf32, #tpu.memory_space<vmem>>) target_semaphore(%130 : memref<!tpu.dma_semaphore, #tpu.memory_space<semaphore_mem>>)
    %c0_i32_63 = arith.constant 0 : i32
    %131 = arith.cmpi eq, %arg1, %c0_i32_63 : i32
    %132 = arith.extui %131 : i1 to i32
    %c0_i32_64 = arith.constant 0 : i32
    %133 = arith.cmpi ne, %132, %c0_i32_64 : i32
    scf.if %133 {
      %cst_141 = arith.constant -1.000000e+30 : f32
      %242 = vector.broadcast %cst_141 : f32 to vector<16x1xf32>
      %c0_142 = arith.constant 0 : index
      %c0_143 = arith.constant 0 : index
      %243 = vector.load %arg11[%c0_142, %c0_143] : memref<16x1xf32, #tpu.memory_space<vmem>>, vector<16x1xf32>
      tpu.vector_store %arg11[%c0_142, %c0_143], %242 {strides = array<i32>} : memref<16x1xf32, #tpu.memory_space<vmem>>, vector<16x1xf32>,
      %cst_144 = arith.constant 0.000000e+00 : f32
      %244 = vector.broadcast %cst_144 : f32 to vector<16x1xf32>
      %c0_145 = arith.constant 0 : index
      %c0_146 = arith.constant 0 : index
      %245 = vector.load %arg12[%c0_145, %c0_146] : memref<16x1xf32, #tpu.memory_space<vmem>>, vector<16x1xf32>
      tpu.vector_store %arg12[%c0_145, %c0_146], %244 {strides = array<i32>} : memref<16x1xf32, #tpu.memory_space<vmem>>, vector<16x1xf32>,
      %cst_147 = arith.constant 0.000000e+00 : f32
      %246 = vector.broadcast %cst_147 : f32 to vector<16x1xf32>
      %c0_148 = arith.constant 0 : index
      %c0_149 = arith.constant 0 : index
      %247 = vector.load %arg13[%c0_148, %c0_149] : memref<16x1xf32, #tpu.memory_space<vmem>>, vector<16x1xf32>
      tpu.vector_store %arg13[%c0_148, %c0_149], %246 {strides = array<i32>} : memref<16x1xf32, #tpu.memory_space<vmem>>, vector<16x1xf32>,
    } else {
    }
    %c0_65 = arith.constant 0 : index
    %c0_66 = arith.constant 0 : index
    %134 = vector.load %arg3[%c0_65, %c0_66] : memref<16x128xbf16, #tpu.memory_space<vmem>>, vector<16x128xbf16>
    %c0_67 = arith.constant 0 : index
    %c0_68 = arith.constant 0 : index
    %135 = vector.load %arg4[%c0_67, %c0_68] : memref<128x128xbf16, #tpu.memory_space<vmem>>, vector<128x128xbf16>
    %cst = arith.constant dense<0.000000e+00> : vector<16x128xf32>
    %136 = tpu.matmul %134, %135, %cst {dimension_numbers = #tpu.dot_dimension_numbers<[1], [1], [0], [0], [0, 0, 1, 0], [], []>} : vector<16x128xbf16>, vector<128x128xbf16>, vector<16x128xf32> -> vector<16x128xf32>
    %c0_i32_69 = arith.constant 0 : i32
    %137 = tpu.memref_slice %arg7[%6, %2] : memref<256x256xf32, #tpu.memory_space<any>> -> memref<1x128xf32, #tpu.memory_space<any>>
    %c0_i32_70 = arith.constant 0 : i32
    %c0_i32_71 = arith.constant 0 : i32
    %138 = tpu.memref_slice %arg9[%c0_i32_70, %c0_i32_71] : memref<16x128xf32, #tpu.memory_space<vmem>> -> memref<1x128xf32, #tpu.memory_space<vmem>>
    %139 = tpu.memref_slice %arg10[%c0_i32_69] : memref<16x!tpu.dma_semaphore, #tpu.memory_space<semaphore_mem>> -> memref<1x!tpu.dma_semaphore, #tpu.memory_space<semaphore_mem>>
    %140 = tpu.memref_squeeze %139 : memref<1x!tpu.dma_semaphore, #tpu.memory_space<semaphore_mem>> -> memref<!tpu.dma_semaphore, #tpu.memory_space<semaphore_mem>>
    tpu.wait_dma2 semaphore(%140 : memref<!tpu.dma_semaphore, #tpu.memory_space<semaphore_mem>>) src(%137 : memref<1x128xf32, #tpu.memory_space<any>>) dst(%138 : memref<1x128xf32, #tpu.memory_space<vmem>>)
    %c1_i32_72 = arith.constant 1 : i32
    %141 = tpu.memref_slice %arg7[%14, %2] : memref<256x256xf32, #tpu.memory_space<any>> -> memref<1x128xf32, #tpu.memory_space<any>>
    %c1_i32_73 = arith.constant 1 : i32
    %c0_i32_74 = arith.constant 0 : i32
    %142 = tpu.memref_slice %arg9[%c1_i32_73, %c0_i32_74] : memref<16x128xf32, #tpu.memory_space<vmem>> -> memref<1x128xf32, #tpu.memory_space<vmem>>
    %143 = tpu.memref_slice %arg10[%c1_i32_72] : memref<16x!tpu.dma_semaphore, #tpu.memory_space<semaphore_mem>> -> memref<1x!tpu.dma_semaphore, #tpu.memory_space<semaphore_mem>>
    %144 = tpu.memref_squeeze %143 : memref<1x!tpu.dma_semaphore, #tpu.memory_space<semaphore_mem>> -> memref<!tpu.dma_semaphore, #tpu.memory_space<semaphore_mem>>
    tpu.wait_dma2 semaphore(%144 : memref<!tpu.dma_semaphore, #tpu.memory_space<semaphore_mem>>) src(%141 : memref<1x128xf32, #tpu.memory_space<any>>) dst(%142 : memref<1x128xf32, #tpu.memory_space<vmem>>)
    %c2_i32_75 = arith.constant 2 : i32
    %145 = tpu.memref_slice %arg7[%22, %2] : memref<256x256xf32, #tpu.memory_space<any>> -> memref<1x128xf32, #tpu.memory_space<any>>
    %c2_i32_76 = arith.constant 2 : i32
    %c0_i32_77 = arith.constant 0 : i32
    %146 = tpu.memref_slice %arg9[%c2_i32_76, %c0_i32_77] : memref<16x128xf32, #tpu.memory_space<vmem>> -> memref<1x128xf32, #tpu.memory_space<vmem>>
    %147 = tpu.memref_slice %arg10[%c2_i32_75] : memref<16x!tpu.dma_semaphore, #tpu.memory_space<semaphore_mem>> -> memref<1x!tpu.dma_semaphore, #tpu.memory_space<semaphore_mem>>
    %148 = tpu.memref_squeeze %147 : memref<1x!tpu.dma_semaphore, #tpu.memory_space<semaphore_mem>> -> memref<!tpu.dma_semaphore, #tpu.memory_space<semaphore_mem>>
    tpu.wait_dma2 semaphore(%148 : memref<!tpu.dma_semaphore, #tpu.memory_space<semaphore_mem>>) src(%145 : memref<1x128xf32, #tpu.memory_space<any>>) dst(%146 : memref<1x128xf32, #tpu.memory_space<vmem>>)
    %c3_i32_78 = arith.constant 3 : i32
    %149 = tpu.memref_slice %arg7[%30, %2] : memref<256x256xf32, #tpu.memory_space<any>> -> memref<1x128xf32, #tpu.memory_space<any>>
    %c3_i32_79 = arith.constant 3 : i32
    %c0_i32_80 = arith.constant 0 : i32
    %150 = tpu.memref_slice %arg9[%c3_i32_79, %c0_i32_80] : memref<16x128xf32, #tpu.memory_space<vmem>> -> memref<1x128xf32, #tpu.memory_space<vmem>>
    %151 = tpu.memref_slice %arg10[%c3_i32_78] : memref<16x!tpu.dma_semaphore, #tpu.memory_space<semaphore_mem>> -> memref<1x!tpu.dma_semaphore, #tpu.memory_space<semaphore_mem>>
    %152 = tpu.memref_squeeze %151 : memref<1x!tpu.dma_semaphore, #tpu.memory_space<semaphore_mem>> -> memref<!tpu.dma_semaphore, #tpu.memory_space<semaphore_mem>>
    tpu.wait_dma2 semaphore(%152 : memref<!tpu.dma_semaphore, #tpu.memory_space<semaphore_mem>>) src(%149 : memref<1x128xf32, #tpu.memory_space<any>>) dst(%150 : memref<1x128xf32, #tpu.memory_space<vmem>>)
    %c4_i32_81 = arith.constant 4 : i32
    %153 = tpu.memref_slice %arg7[%38, %2] : memref<256x256xf32, #tpu.memory_space<any>> -> memref<1x128xf32, #tpu.memory_space<any>>
    %c4_i32_82 = arith.constant 4 : i32
    %c0_i32_83 = arith.constant 0 : i32
    %154 = tpu.memref_slice %arg9[%c4_i32_82, %c0_i32_83] : memref<16x128xf32, #tpu.memory_space<vmem>> -> memref<1x128xf32, #tpu.memory_space<vmem>>
    %155 = tpu.memref_slice %arg10[%c4_i32_81] : memref<16x!tpu.dma_semaphore, #tpu.memory_space<semaphore_mem>> -> memref<1x!tpu.dma_semaphore, #tpu.memory_space<semaphore_mem>>
    %156 = tpu.memref_squeeze %155 : memref<1x!tpu.dma_semaphore, #tpu.memory_space<semaphore_mem>> -> memref<!tpu.dma_semaphore, #tpu.memory_space<semaphore_mem>>
    tpu.wait_dma2 semaphore(%156 : memref<!tpu.dma_semaphore, #tpu.memory_space<semaphore_mem>>) src(%153 : memref<1x128xf32, #tpu.memory_space<any>>) dst(%154 : memref<1x128xf32, #tpu.memory_space<vmem>>)
    %c5_i32_84 = arith.constant 5 : i32
    %157 = tpu.memref_slice %arg7[%46, %2] : memref<256x256xf32, #tpu.memory_space<any>> -> memref<1x128xf32, #tpu.memory_space<any>>
    %c5_i32_85 = arith.constant 5 : i32
    %c0_i32_86 = arith.constant 0 : i32
    %158 = tpu.memref_slice %arg9[%c5_i32_85, %c0_i32_86] : memref<16x128xf32, #tpu.memory_space<vmem>> -> memref<1x128xf32, #tpu.memory_space<vmem>>
    %159 = tpu.memref_slice %arg10[%c5_i32_84] : memref<16x!tpu.dma_semaphore, #tpu.memory_space<semaphore_mem>> -> memref<1x!tpu.dma_semaphore, #tpu.memory_space<semaphore_mem>>
    %160 = tpu.memref_squeeze %159 : memref<1x!tpu.dma_semaphore, #tpu.memory_space<semaphore_mem>> -> memref<!tpu.dma_semaphore, #tpu.memory_space<semaphore_mem>>
    tpu.wait_dma2 semaphore(%160 : memref<!tpu.dma_semaphore, #tpu.memory_space<semaphore_mem>>) src(%157 : memref<1x128xf32, #tpu.memory_space<any>>) dst(%158 : memref<1x128xf32, #tpu.memory_space<vmem>>)
    %c6_i32_87 = arith.constant 6 : i32
    %161 = tpu.memref_slice %arg7[%54, %2] : memref<256x256xf32, #tpu.memory_space<any>> -> memref<1x128xf32, #tpu.memory_space<any>>
    %c6_i32_88 = arith.constant 6 : i32
    %c0_i32_89 = arith.constant 0 : i32
    %162 = tpu.memref_slice %arg9[%c6_i32_88, %c0_i32_89] : memref<16x128xf32, #tpu.memory_space<vmem>> -> memref<1x128xf32, #tpu.memory_space<vmem>>
    %163 = tpu.memref_slice %arg10[%c6_i32_87] : memref<16x!tpu.dma_semaphore, #tpu.memory_space<semaphore_mem>> -> memref<1x!tpu.dma_semaphore, #tpu.memory_space<semaphore_mem>>
    %164 = tpu.memref_squeeze %163 : memref<1x!tpu.dma_semaphore, #tpu.memory_space<semaphore_mem>> -> memref<!tpu.dma_semaphore, #tpu.memory_space<semaphore_mem>>
    tpu.wait_dma2 semaphore(%164 : memref<!tpu.dma_semaphore, #tpu.memory_space<semaphore_mem>>) src(%161 : memref<1x128xf32, #tpu.memory_space<any>>) dst(%162 : memref<1x128xf32, #tpu.memory_space<vmem>>)
    %c7_i32_90 = arith.constant 7 : i32
    %165 = tpu.memref_slice %arg7[%62, %2] : memref<256x256xf32, #tpu.memory_space<any>> -> memref<1x128xf32, #tpu.memory_space<any>>
    %c7_i32_91 = arith.constant 7 : i32
    %c0_i32_92 = arith.constant 0 : i32
    %166 = tpu.memref_slice %arg9[%c7_i32_91, %c0_i32_92] : memref<16x128xf32, #tpu.memory_space<vmem>> -> memref<1x128xf32, #tpu.memory_space<vmem>>
    %167 = tpu.memref_slice %arg10[%c7_i32_90] : memref<16x!tpu.dma_semaphore, #tpu.memory_space<semaphore_mem>> -> memref<1x!tpu.dma_semaphore, #tpu.memory_space<semaphore_mem>>
    %168 = tpu.memref_squeeze %167 : memref<1x!tpu.dma_semaphore, #tpu.memory_space<semaphore_mem>> -> memref<!tpu.dma_semaphore, #tpu.memory_space<semaphore_mem>>
    tpu.wait_dma2 semaphore(%168 : memref<!tpu.dma_semaphore, #tpu.memory_space<semaphore_mem>>) src(%165 : memref<1x128xf32, #tpu.memory_space<any>>) dst(%166 : memref<1x128xf32, #tpu.memory_space<vmem>>)
    %c8_i32_93 = arith.constant 8 : i32
    %169 = tpu.memref_slice %arg7[%70, %2] : memref<256x256xf32, #tpu.memory_space<any>> -> memref<1x128xf32, #tpu.memory_space<any>>
    %c8_i32_94 = arith.constant 8 : i32
    %c0_i32_95 = arith.constant 0 : i32
    %170 = tpu.memref_slice %arg9[%c8_i32_94, %c0_i32_95] : memref<16x128xf32, #tpu.memory_space<vmem>> -> memref<1x128xf32, #tpu.memory_space<vmem>>
    %171 = tpu.memref_slice %arg10[%c8_i32_93] : memref<16x!tpu.dma_semaphore, #tpu.memory_space<semaphore_mem>> -> memref<1x!tpu.dma_semaphore, #tpu.memory_space<semaphore_mem>>
    %172 = tpu.memref_squeeze %171 : memref<1x!tpu.dma_semaphore, #tpu.memory_space<semaphore_mem>> -> memref<!tpu.dma_semaphore, #tpu.memory_space<semaphore_mem>>
    tpu.wait_dma2 semaphore(%172 : memref<!tpu.dma_semaphore, #tpu.memory_space<semaphore_mem>>) src(%169 : memref<1x128xf32, #tpu.memory_space<any>>) dst(%170 : memref<1x128xf32, #tpu.memory_space<vmem>>)
    %c9_i32_96 = arith.constant 9 : i32
    %173 = tpu.memref_slice %arg7[%78, %2] : memref<256x256xf32, #tpu.memory_space<any>> -> memref<1x128xf32, #tpu.memory_space<any>>
    %c9_i32_97 = arith.constant 9 : i32
    %c0_i32_98 = arith.constant 0 : i32
    %174 = tpu.memref_slice %arg9[%c9_i32_97, %c0_i32_98] : memref<16x128xf32, #tpu.memory_space<vmem>> -> memref<1x128xf32, #tpu.memory_space<vmem>>
    %175 = tpu.memref_slice %arg10[%c9_i32_96] : memref<16x!tpu.dma_semaphore, #tpu.memory_space<semaphore_mem>> -> memref<1x!tpu.dma_semaphore, #tpu.memory_space<semaphore_mem>>
    %176 = tpu.memref_squeeze %175 : memref<1x!tpu.dma_semaphore, #tpu.memory_space<semaphore_mem>> -> memref<!tpu.dma_semaphore, #tpu.memory_space<semaphore_mem>>
    tpu.wait_dma2 semaphore(%176 : memref<!tpu.dma_semaphore, #tpu.memory_space<semaphore_mem>>) src(%173 : memref<1x128xf32, #tpu.memory_space<any>>) dst(%174 : memref<1x128xf32, #tpu.memory_space<vmem>>)
    %c10_i32_99 = arith.constant 10 : i32
    %177 = tpu.memref_slice %arg7[%86, %2] : memref<256x256xf32, #tpu.memory_space<any>> -> memref<1x128xf32, #tpu.memory_space<any>>
    %c10_i32_100 = arith.constant 10 : i32
    %c0_i32_101 = arith.constant 0 : i32
    %178 = tpu.memref_slice %arg9[%c10_i32_100, %c0_i32_101] : memref<16x128xf32, #tpu.memory_space<vmem>> -> memref<1x128xf32, #tpu.memory_space<vmem>>
    %179 = tpu.memref_slice %arg10[%c10_i32_99] : memref<16x!tpu.dma_semaphore, #tpu.memory_space<semaphore_mem>> -> memref<1x!tpu.dma_semaphore, #tpu.memory_space<semaphore_mem>>
    %180 = tpu.memref_squeeze %179 : memref<1x!tpu.dma_semaphore, #tpu.memory_space<semaphore_mem>> -> memref<!tpu.dma_semaphore, #tpu.memory_space<semaphore_mem>>
    tpu.wait_dma2 semaphore(%180 : memref<!tpu.dma_semaphore, #tpu.memory_space<semaphore_mem>>) src(%177 : memref<1x128xf32, #tpu.memory_space<any>>) dst(%178 : memref<1x128xf32, #tpu.memory_space<vmem>>)
    %c11_i32_102 = arith.constant 11 : i32
    %181 = tpu.memref_slice %arg7[%94, %2] : memref<256x256xf32, #tpu.memory_space<any>> -> memref<1x128xf32, #tpu.memory_space<any>>
    %c11_i32_103 = arith.constant 11 : i32
    %c0_i32_104 = arith.constant 0 : i32
    %182 = tpu.memref_slice %arg9[%c11_i32_103, %c0_i32_104] : memref<16x128xf32, #tpu.memory_space<vmem>> -> memref<1x128xf32, #tpu.memory_space<vmem>>
    %183 = tpu.memref_slice %arg10[%c11_i32_102] : memref<16x!tpu.dma_semaphore, #tpu.memory_space<semaphore_mem>> -> memref<1x!tpu.dma_semaphore, #tpu.memory_space<semaphore_mem>>
    %184 = tpu.memref_squeeze %183 : memref<1x!tpu.dma_semaphore, #tpu.memory_space<semaphore_mem>> -> memref<!tpu.dma_semaphore, #tpu.memory_space<semaphore_mem>>
    tpu.wait_dma2 semaphore(%184 : memref<!tpu.dma_semaphore, #tpu.memory_space<semaphore_mem>>) src(%181 : memref<1x128xf32, #tpu.memory_space<any>>) dst(%182 : memref<1x128xf32, #tpu.memory_space<vmem>>)
    %c12_i32_105 = arith.constant 12 : i32
    %185 = tpu.memref_slice %arg7[%102, %2] : memref<256x256xf32, #tpu.memory_space<any>> -> memref<1x128xf32, #tpu.memory_space<any>>
    %c12_i32_106 = arith.constant 12 : i32
    %c0_i32_107 = arith.constant 0 : i32
    %186 = tpu.memref_slice %arg9[%c12_i32_106, %c0_i32_107] : memref<16x128xf32, #tpu.memory_space<vmem>> -> memref<1x128xf32, #tpu.memory_space<vmem>>
    %187 = tpu.memref_slice %arg10[%c12_i32_105] : memref<16x!tpu.dma_semaphore, #tpu.memory_space<semaphore_mem>> -> memref<1x!tpu.dma_semaphore, #tpu.memory_space<semaphore_mem>>
    %188 = tpu.memref_squeeze %187 : memref<1x!tpu.dma_semaphore, #tpu.memory_space<semaphore_mem>> -> memref<!tpu.dma_semaphore, #tpu.memory_space<semaphore_mem>>
    tpu.wait_dma2 semaphore(%188 : memref<!tpu.dma_semaphore, #tpu.memory_space<semaphore_mem>>) src(%185 : memref<1x128xf32, #tpu.memory_space<any>>) dst(%186 : memref<1x128xf32, #tpu.memory_space<vmem>>)
    %c13_i32_108 = arith.constant 13 : i32
    %189 = tpu.memref_slice %arg7[%110, %2] : memref<256x256xf32, #tpu.memory_space<any>> -> memref<1x128xf32, #tpu.memory_space<any>>
    %c13_i32_109 = arith.constant 13 : i32
    %c0_i32_110 = arith.constant 0 : i32
    %190 = tpu.memref_slice %arg9[%c13_i32_109, %c0_i32_110] : memref<16x128xf32, #tpu.memory_space<vmem>> -> memref<1x128xf32, #tpu.memory_space<vmem>>
    %191 = tpu.memref_slice %arg10[%c13_i32_108] : memref<16x!tpu.dma_semaphore, #tpu.memory_space<semaphore_mem>> -> memref<1x!tpu.dma_semaphore, #tpu.memory_space<semaphore_mem>>
    %192 = tpu.memref_squeeze %191 : memref<1x!tpu.dma_semaphore, #tpu.memory_space<semaphore_mem>> -> memref<!tpu.dma_semaphore, #tpu.memory_space<semaphore_mem>>
    tpu.wait_dma2 semaphore(%192 : memref<!tpu.dma_semaphore, #tpu.memory_space<semaphore_mem>>) src(%189 : memref<1x128xf32, #tpu.memory_space<any>>) dst(%190 : memref<1x128xf32, #tpu.memory_space<vmem>>)
    %c14_i32_111 = arith.constant 14 : i32
    %193 = tpu.memref_slice %arg7[%118, %2] : memref<256x256xf32, #tpu.memory_space<any>> -> memref<1x128xf32, #tpu.memory_space<any>>
    %c14_i32_112 = arith.constant 14 : i32
    %c0_i32_113 = arith.constant 0 : i32
    %194 = tpu.memref_slice %arg9[%c14_i32_112, %c0_i32_113] : memref<16x128xf32, #tpu.memory_space<vmem>> -> memref<1x128xf32, #tpu.memory_space<vmem>>
    %195 = tpu.memref_slice %arg10[%c14_i32_111] : memref<16x!tpu.dma_semaphore, #tpu.memory_space<semaphore_mem>> -> memref<1x!tpu.dma_semaphore, #tpu.memory_space<semaphore_mem>>
    %196 = tpu.memref_squeeze %195 : memref<1x!tpu.dma_semaphore, #tpu.memory_space<semaphore_mem>> -> memref<!tpu.dma_semaphore, #tpu.memory_space<semaphore_mem>>
    tpu.wait_dma2 semaphore(%196 : memref<!tpu.dma_semaphore, #tpu.memory_space<semaphore_mem>>) src(%193 : memref<1x128xf32, #tpu.memory_space<any>>) dst(%194 : memref<1x128xf32, #tpu.memory_space<vmem>>)
    %c15_i32_114 = arith.constant 15 : i32
    %197 = tpu.memref_slice %arg7[%126, %2] : memref<256x256xf32, #tpu.memory_space<any>> -> memref<1x128xf32, #tpu.memory_space<any>>
    %c15_i32_115 = arith.constant 15 : i32
    %c0_i32_116 = arith.constant 0 : i32
    %198 = tpu.memref_slice %arg9[%c15_i32_115, %c0_i32_116] : memref<16x128xf32, #tpu.memory_space<vmem>> -> memref<1x128xf32, #tpu.memory_space<vmem>>
    %199 = tpu.memref_slice %arg10[%c15_i32_114] : memref<16x!tpu.dma_semaphore, #tpu.memory_space<semaphore_mem>> -> memref<1x!tpu.dma_semaphore, #tpu.memory_space<semaphore_mem>>
    %200 = tpu.memref_squeeze %199 : memref<1x!tpu.dma_semaphore, #tpu.memory_space<semaphore_mem>> -> memref<!tpu.dma_semaphore, #tpu.memory_space<semaphore_mem>>
    tpu.wait_dma2 semaphore(%200 : memref<!tpu.dma_semaphore, #tpu.memory_space<semaphore_mem>>) src(%197 : memref<1x128xf32, #tpu.memory_space<any>>) dst(%198 : memref<1x128xf32, #tpu.memory_space<vmem>>)
    %c0_117 = arith.constant 0 : index
    %c0_118 = arith.constant 0 : index
    %201 = vector.load %arg9[%c0_117, %c0_118] : memref<16x128xf32, #tpu.memory_space<vmem>>, vector<16x128xf32>
    %202 = arith.addf %136, %201 : vector<16x128xf32>
    %203 = vector.broadcast %0 : f32 to vector<16x128xf32>
    %204 = arith.mulf %202, %203 : vector<16x128xf32>
    %205 = tpu.iota {dimensions = array<i32: 1>} : vector<16x128xi32>
    %c128_i32_119 = arith.constant 128 : i32
    %206 = arith.muli %arg1, %c128_i32_119 : i32
    %207 = vector.broadcast %206 : i32 to vector<16x128xi32>
    %208 = arith.addi %205, %207 : vector<16x128xi32>
    %c200_i32 = arith.constant 200 : i32
    %209 = vector.broadcast %c200_i32 : i32 to vector<16x128xi32>
    %210 = arith.cmpi slt, %208, %209 : vector<16x128xi32>
    %cst_120 = arith.constant -1.000000e+30 : f32
    %211 = vector.broadcast %cst_120 : f32 to vector<16x128xf32>
    %212 = arith.select %210, %204, %211 : vector<16x128xi1>, vector<16x128xf32>
    %c0_121 = arith.constant 0 : index
    %c0_122 = arith.constant 0 : index
    %213 = vector.load %arg11[%c0_121, %c0_122] : memref<16x1xf32, #tpu.memory_space<vmem>>, vector<16x1xf32>
    %cst_123 = arith.constant dense<0xFF800000> : vector<16xf32>
    %214 = vector.multi_reduction <maximumf>, %212, %cst_123 [1] : vector<16x128xf32> to vector<16xf32>
    %215 = vector.shape_cast %214 : vector<16xf32> to vector<16x1xf32>
    %216 = arith.maximumf %213, %215 : vector<16x1xf32>
    %217 = arith.subf %213, %216 : vector<16x1xf32>
    %218 = math.exp %217 : vector<16x1xf32>
    %219 = vector.broadcast %216 : vector<16x1xf32> to vector<16x128xf32>
    %220 = arith.subf %212, %219 : vector<16x128xf32>
    %221 = math.exp %220 : vector<16x128xf32>
    %c0_124 = arith.constant 0 : index
    %c0_125 = arith.constant 0 : index
    %222 = vector.load %arg12[%c0_124, %c0_125] : memref<16x1xf32, #tpu.memory_space<vmem>>, vector<16x1xf32>
    %223 = arith.mulf %218, %222 : vector<16x1xf32>
    %cst_126 = arith.constant dense<0.000000e+00> : vector<16xf32>
    %224 = vector.multi_reduction <add>, %221, %cst_126 [1] : vector<16x128xf32> to vector<16xf32>
    %225 = vector.shape_cast %224 : vector<16xf32> to vector<16x1xf32>
    %226 = arith.addf %223, %225 : vector<16x1xf32>
    %c0_127 = arith.constant 0 : index
    %c0_128 = arith.constant 0 : index
    %227 = vector.load %arg12[%c0_127, %c0_128] : memref<16x1xf32, #tpu.memory_space<vmem>>, vector<16x1xf32>
    tpu.vector_store %arg12[%c0_127, %c0_128], %226 {strides = array<i32>} : memref<16x1xf32, #tpu.memory_space<vmem>>, vector<16x1xf32>,
    %c0_129 = arith.constant 0 : index
    %c0_130 = arith.constant 0 : index
    %228 = vector.load %arg11[%c0_129, %c0_130] : memref<16x1xf32, #tpu.memory_space<vmem>>, vector<16x1xf32>
    tpu.vector_store %arg11[%c0_129, %c0_130], %216 {strides = array<i32>} : memref<16x1xf32, #tpu.memory_space<vmem>>, vector<16x1xf32>,
    %c0_131 = arith.constant 0 : index
    %c0_132 = arith.constant 0 : index
    %229 = vector.load %arg5[%c0_131, %c0_132] : memref<16x1xi32, #tpu.memory_space<vmem>>, vector<16x1xi32>
    %230 = vector.broadcast %229 : vector<16x1xi32> to vector<16x128xi32>
    %231 = arith.cmpi eq, %208, %230 : vector<16x128xi32>
    %c0_133 = arith.constant 0 : index
    %c0_134 = arith.constant 0 : index
    %232 = vector.load %arg13[%c0_133, %c0_134] : memref<16x1xf32, #tpu.memory_space<vmem>>, vector<16x1xf32>
    %cst_135 = arith.constant 0.000000e+00 : f32
    %233 = vector.broadcast %cst_135 : f32 to vector<16x128xf32>
    %234 = arith.select %231, %212, %233 : vector<16x128xi1>, vector<16x128xf32>
    %cst_136 = arith.constant dense<0.000000e+00> : vector<16xf32>
    %235 = vector.multi_reduction <add>, %234, %cst_136 [1] : vector<16x128xf32> to vector<16xf32>
    %236 = vector.shape_cast %235 : vector<16xf32> to vector<16x1xf32>
    %237 = arith.addf %232, %236 : vector<16x1xf32>
    %c0_137 = arith.constant 0 : index
    %c0_138 = arith.constant 0 : index
    %238 = vector.load %arg13[%c0_137, %c0_138] : memref<16x1xf32, #tpu.memory_space<vmem>>, vector<16x1xf32>
    tpu.vector_store %arg13[%c0_137, %c0_138], %237 {strides = array<i32>} : memref<16x1xf32, #tpu.memory_space<vmem>>, vector<16x1xf32>,
    %c1_i32_139 = arith.constant 1 : i32
    %239 = arith.cmpi eq, %arg1, %c1_i32_139 : i32
    %240 = arith.extui %239 : i1 to i32
    %c0_i32_140 = arith.constant 0 : i32
    %241 = arith.cmpi ne, %240, %c0_i32_140 : i32
    scf.if %241 {
      %c0_141 = arith.constant 0 : index
      %c0_142 = arith.constant 0 : index
      %242 = vector.load %arg11[%c0_141, %c0_142] : memref<16x1xf32, #tpu.memory_space<vmem>>, vector<16x1xf32>
      %c0_143 = arith.constant 0 : index
      %c0_144 = arith.constant 0 : index
      %243 = vector.load %arg12[%c0_143, %c0_144] : memref<16x1xf32, #tpu.memory_space<vmem>>, vector<16x1xf32>
      %244 = math.log %243 : vector<16x1xf32>
      %245 = arith.addf %242, %244 : vector<16x1xf32>
      %c0_145 = arith.constant 0 : index
      %c0_146 = arith.constant 0 : index
      %246 = vector.load %arg13[%c0_145, %c0_146] : memref<16x1xf32, #tpu.memory_space<vmem>>, vector<16x1xf32>
      %247 = arith.subf %245, %246 : vector<16x1xf32>
      %c0_147 = arith.constant 0 : index
      %c0_148 = arith.constant 0 : index
      %248 = vector.load %arg8[%c0_147, %c0_148] : memref<16x1xf32, #tpu.memory_space<vmem>>, vector<16x1xf32>
      tpu.vector_store %arg8[%c0_147, %c0_148], %247 {strides = array<i32>} : memref<16x1xf32, #tpu.memory_space<vmem>>, vector<16x1xf32>,
    } else {
    }
    return
  }
  func.func @transform_0(%arg0: i32, %arg1: i32, %arg2: memref<32xi32, #tpu.memory_space<smem>>) -> (i32, i32) {
    %c0_i32 = arith.constant 0 : i32
    %c0_i32_0 = arith.constant 0 : i32
    return %arg0, %c0_i32 : i32, i32
  }
  func.func @transform_1(%arg0: i32, %arg1: i32, %arg2: memref<32xi32, #tpu.memory_space<smem>>) -> (i32, i32) {
    %c0_i32 = arith.constant 0 : i32
    %c0_i32_0 = arith.constant 0 : i32
    return %arg1, %c0_i32 : i32, i32
  }
  func.func @transform_2(%arg0: i32, %arg1: i32, %arg2: memref<32xi32, #tpu.memory_space<smem>>) -> (i32, i32) {
    %c0_i32 = arith.constant 0 : i32
    %c0_i32_0 = arith.constant 0 : i32
    return %arg0, %c0_i32 : i32, i32
  }
  func.func @transform_3(%arg0: i32, %arg1: i32, %arg2: memref<32xi32, #tpu.memory_space<smem>>) -> i32 {
    %c0_i32 = arith.constant 0 : i32
    %c0_i32_0 = arith.constant 0 : i32
    return %c0_i32 : i32
  }
  func.func @transform_5(%arg0: i32, %arg1: i32, %arg2: memref<32xi32, #tpu.memory_space<smem>>) -> (i32, i32) {
    %c0_i32 = arith.constant 0 : i32
    %c0_i32_0 = arith.constant 0 : i32
    return %arg0, %c0_i32 : i32, i32
  }
}

</mosaic_0001>

<llo_original>
// kernel: tpu_custom_call.1
$region0: #{tpu_custom_call.1}
  #allocation0 [shape = 'u32[]', space=smem, size = 0x4, offset = 0x4, fixed_abs, tag = 'smem constant byte address 0x4 - core index']
  #allocation1 [shape = 'u32[72,128]{1,0:T(1,128)}', space=vmem, size = 0x9000, scoped, tag = 'internal scratch']
  #allocation2 [shape = 'f32[16,128]{1,0:T(8,128)}', space=vmem, size = 0x2000, scoped, tag = 'scratch operand']
  #allocation3 [shape = 's32[16]{0}', space=sflag, size = 0x40, scoped, tag = 'scratch operand']
  #allocation4 [shape = 'f32[16,1]{1,0:T(8,128)}', space=vmem, size = 0x2000, scoped, tag = 'scratch operand']
  #allocation5 [shape = 'f32[16,1]{1,0:T(8,128)}', space=vmem, size = 0x2000, scoped, tag = 'scratch operand']
  #allocation6 [shape = 'f32[16,1]{1,0:T(8,128)}', space=vmem, size = 0x2000, scoped, tag = 'scratch operand']
  #allocation7 [shape = 's32[1]{0}', space=sflag, size = 0x4, scoped, tag = 'scoped memory for tpu_custom_call.1']
  #allocation8 [shape = 'u8[512]{0}', space=smem, size = 0x200, scoped, tag = 'prefetched SMEM operand 0']
  #allocation9 [shape = 'f32[1]{0:T(128)S(6)}', space=smem, size = 0x200, scoped, tag = 'scoped memory for tpu_custom_call.1']
  #allocation12 [shape = 's32[]', space=sflag, size = 0x4, offset = 0, fixed_abs, tag = 'sflag constant byte address 0x0 - dummy sync flag']
  #allocation13 [shape = 's32[]', space=sflag, size = 0x4, offset = 0, fixed_abs, tag = 'sflag constant byte address 0x0 - dummy sync flag']
  #allocation14 [shape = 'u32[]', space=smem, size = 0x4, offset = 0x44, fixed_abs, tag = 'smem constant byte address 0x44 - assertion arg 0']
  #allocation15 [shape = 'u32[]', space=smem, size = 0x4, offset = 0x48, fixed_abs, tag = 'smem constant byte address 0x48 - assertion arg 1']
  #allocation16 [shape = 's32[]', space=sflag, size = 0x4, offset = 0, fixed_abs, tag = 'sflag constant byte address 0x0 - dummy sync flag']
  #allocation17 [shape = 's32[]', space=sflag, size = 0x4, offset = 0, fixed_abs, tag = 'sflag constant byte address 0x0 - dummy sync flag']
  #allocation18 [shape = 's32[]', space=sflag, size = 0x4, offset = 0, fixed_abs, tag = 'sflag constant byte address 0x0 - dummy sync flag']
  #allocation19 [shape = 's32[]', space=sflag, size = 0x4, offset = 0, fixed_abs, tag = 'sflag constant byte address 0x0 - dummy sync flag']
  #allocation20 [shape = 's32[]', space=sflag, size = 0x4, offset = 0, fixed_abs, tag = 'sflag constant byte address 0x0 - dummy sync flag']
  #allocation21 [shape = 's32[]', space=sflag, size = 0x4, offset = 0, fixed_abs, tag = 'sflag constant byte address 0x0 - dummy sync flag']
  #allocation22 [shape = 's32[]', space=sflag, size = 0x4, offset = 0, fixed_abs, tag = 'sflag constant byte address 0x0 - dummy sync flag']
  #allocation23 [shape = 's32[]', space=sflag, size = 0x4, offset = 0, fixed_abs, tag = 'sflag constant byte address 0x0 - dummy sync flag']
  #allocation24 [shape = 's32[]', space=sflag, size = 0x4, offset = 0, fixed_abs, tag = 'sflag constant byte address 0x0 - dummy sync flag']
  #allocation25 [shape = 's32[]', space=sflag, size = 0x4, offset = 0, fixed_abs, tag = 'sflag constant byte address 0x0 - dummy sync flag']
  #allocation26 [shape = 's32[]', space=sflag, size = 0x4, offset = 0, fixed_abs, tag = 'sflag constant byte address 0x0 - dummy sync flag']
  #allocation27 [shape = 's32[]', space=sflag, size = 0x4, offset = 0, fixed_abs, tag = 'sflag constant byte address 0x0 - dummy sync flag']
  #allocation28 [shape = 's32[]', space=sflag, size = 0x4, offset = 0, fixed_abs, tag = 'sflag constant byte address 0x0 - dummy sync flag']
  #allocation29 [shape = 's32[]', space=sflag, size = 0x4, offset = 0, fixed_abs, tag = 'sflag constant byte address 0x0 - dummy sync flag']
  #allocation30 [shape = 's32[]', space=sflag, size = 0x4, offset = 0, fixed_abs, tag = 'sflag constant byte address 0x0 - dummy sync flag']
  #allocation31 [shape = 's32[]', space=sflag, size = 0x4, offset = 0, fixed_abs, tag = 'sflag constant byte address 0x0 - dummy sync flag']
  #allocation32 [shape = 's32[]', space=sflag, size = 0x4, offset = 0, fixed_abs, tag = 'sflag constant byte address 0x0 - dummy sync flag']
  #allocation33 [shape = 's32[]', space=sflag, size = 0x4, offset = 0, fixed_abs, tag = 'sflag constant byte address 0x0 - dummy sync flag']
  #allocation34 [shape = 's32[]', space=sflag, size = 0x4, offset = 0, fixed_abs, tag = 'sflag constant byte address 0x0 - dummy sync flag']
  #allocation35 [shape = 's32[]', space=sflag, size = 0x4, offset = 0, fixed_abs, tag = 'sflag constant byte address 0x0 - dummy sync flag']
  #allocation36 [shape = 's32[]', space=sflag, size = 0x4, offset = 0, fixed_abs, tag = 'sflag constant byte address 0x0 - dummy sync flag']
  #allocation37 [shape = 's32[]', space=sflag, size = 0x4, offset = 0, fixed_abs, tag = 'sflag constant byte address 0x0 - dummy sync flag']
  #allocation38 [shape = 's32[]', space=sflag, size = 0x4, offset = 0, fixed_abs, tag = 'sflag constant byte address 0x0 - dummy sync flag']
  #allocation39 [shape = 's32[]', space=sflag, size = 0x4, offset = 0, fixed_abs, tag = 'sflag constant byte address 0x0 - dummy sync flag']
  #allocation40 [shape = 's32[]', space=sflag, size = 0x4, offset = 0, fixed_abs, tag = 'sflag constant byte address 0x0 - dummy sync flag']
  #allocation41 [shape = 's32[]', space=sflag, size = 0x4, offset = 0, fixed_abs, tag = 'sflag constant byte address 0x0 - dummy sync flag']
  #allocation42 [shape = 's32[]', space=sflag, size = 0x4, offset = 0, fixed_abs, tag = 'sflag constant byte address 0x0 - dummy sync flag']
  #allocation43 [shape = 's32[]', space=sflag, size = 0x4, offset = 0, fixed_abs, tag = 'sflag constant byte address 0x0 - dummy sync flag']
  #allocation44 [shape = 's32[]', space=sflag, size = 0x4, offset = 0, fixed_abs, tag = 'sflag constant byte address 0x0 - dummy sync flag']
  #allocation45 [shape = 's32[]', space=sflag, size = 0x4, offset = 0, fixed_abs, tag = 'sflag constant byte address 0x0 - dummy sync flag']
  %s0 = inlined_call_operand.vmem [shape: s32[32], index: 0, kind: input, shape index: {}]
  %s1 = inlined_call_operand.vmem [shape: bf16[32,128], index: 1, kind: input, shape index: {}]
  %s2 = inlined_call_operand.hbm [shape: bf16[256,128], index: 2, kind: input, shape index: {}]
  %s3 = inlined_call_operand.vmem [shape: s32[32,1], index: 3, kind: input, shape index: {}]
  %s4 = inlined_call_operand.<no memory space> [shape: f32[1], index: 4, kind: input, shape index: {}]
  %s5 = inlined_call_operand.hbm [shape: f32[256,256], index: 5, kind: input, shape index: {}]
  %s6 = inlined_call_operand.vmem [shape: f32[32,1], index: 6, kind: output, shape index: {}]
  %s7 = sld [smem:[#allocation0]]
  $region125: #{tpu_custom_call.1} parent=0
    _
  %s9 = ssub.s32 1, %s7
  %s10 = scalar_select 0, %s9, %s7
  %s12 = sshll.u32 %s0, 4
  %s13 = int_to_ptr.vmem [resolvable:$true] %s12
  %15 = dma.vmem_to_smem %s13, 16, [#allocation8], [#allocation7]
  %16 = sst [smem:[#allocation9]] %s4
  %18 = dma.done [#allocation7], 16
  %19 = sfence
  $region1: #{tpu_custom_call.1} parent=0
    #allocation10 [shape = 'u8[65536]{0}', space=vmem, size = 0x10000, scoped, tag = 'input window, operand 2']
    #allocation11 [shape = 's32[2]{0}', space=sflag, size = 0x8, scoped, tag = 'scoped memory for tpu_custom_call.1']
    %20 = vsyncpa [#allocation11], 0
    %s21 = scalar_lea.sflag [#allocation11], 1
    %22 = vsyncpa %s21, 0
    loop: start=0, step=1, limit=6
    $region2: #{tpu_custom_call.1} parent=1 // loop_pre_header
      _
    $region3: #{tpu_custom_call.1} parent=1 // loop_header
      %s24 = sphi 0, %s28
      %p25 = scmp.ge.s32.totalorder %s24, 6
      %s31 = sphi 0, %s43
      %s32 = sphi 0, %s39
      %s33 = sphi 0, %s31
      %s34 = sphi 0, %s32
      %s35 = sphi 0, %s33
      %s36 = sphi 0, %s34
      %s46 = sphi 0, %s48
      %s49 = sphi 0, %s46
      %s50 = sphi 0, %s49
      %s66 = sphi 0, %s50
      %s72 = sphi 0, %s74
      %s75 = sphi 0, %s72
      %s76 = sphi 0, %s75
      %s92 = sphi 0, %s76
      %s98 = sphi 0, %s100
      %s101 = sphi 0, %s98
      %s102 = sphi 0, %s101
      %s118 = sphi 0, %s102
      %s122 = sphi 0, %s122
      %s124 = sphi 0, %s122
      %s125 = sphi 0, %s124
      %s139 = sphi 0, %s125
      %s145 = sphi 0, %s147
      %s148 = sphi 0, %s145
      %s149 = sphi 0, %s148
      %s165 = sphi 0, %s149
    $region4: #{tpu_custom_call.1} parent=1 // loop_header_branch
      %27 = sbr.rel (%p25) target = $region8
    $region5: #{tpu_custom_call.1} parent=1 // loop_body
      %s29 = ssub.s32 %s24, 1
      %s30 = ssub.s32 %s24, 2
      %s37 = sadd.s32 1, %s32
      %p38 = scmp.ge.s32.totalorder %s37, 2
      %s39 = scalar_select %p38, 0, %s37
      %s40 = sadd.s32 1, %s31
      %s41 = scalar_select %p38, %s40, %s31
      %p42 = scmp.ge.s32.totalorder %s41, 2
      %s43 = scalar_select %p42, 0, %s41
      %s44 = ssub.s32 %s31, %s43
      %p45 = scmp.eq.s32.totalorder %s44, 0
      %s47 = sadd.s32 %s46, 1
      %s48 = scalar_select %p45, %s46, %s47
      %p51 = pneg %p45
      %p52 = scmp.eq.s32.totalorder %s24, 3
      %p53 = por %p51, %p52
      %p54 = scmp.ne.s32.totalorder %s46, %s49
      %p55 = scmp.eq.s32.totalorder %s24, 0
      %p56 = por %p54, %p55
      %p57 = scmp.ne.s32.totalorder %s46, %s49
      %p58 = scmp.eq.s32.totalorder %s29, 3
      %p59 = por %p57, %p58
      %p60 = scmp.ne.s32.totalorder %s49, %s50
      %p61 = scmp.eq.s32.totalorder %s29, 0
      %p62 = por %p60, %p61
      %p63 = scmp.ne.s32.totalorder %s49, %s50
      %p64 = scmp.eq.s32.totalorder %s30, 3
      %p65 = por %p63, %p64
      %p67 = scmp.ne.s32.totalorder %s50, %s66
      %p68 = scmp.eq.s32.totalorder %s30, 0
      %p69 = por %p67, %p68
      %s70 = ssub.s32 %s32, %s39
      %p71 = scmp.eq.s32.totalorder %s70, 0
      %s73 = sadd.s32 %s72, 1
      %s74 = scalar_select %p71, %s72, %s73
      %p77 = pneg %p71
      %p78 = scmp.eq.s32.totalorder %s24, 3
      %p79 = por %p77, %p78
      %p80 = scmp.ne.s32.totalorder %s72, %s75
      %p81 = scmp.eq.s32.totalorder %s24, 0
      %p82 = por %p80, %p81
      %p83 = scmp.ne.s32.totalorder %s72, %s75
      %p84 = scmp.eq.s32.totalorder %s29, 3
      %p85 = por %p83, %p84
      %p86 = scmp.ne.s32.totalorder %s75, %s76
      %p87 = scmp.eq.s32.totalorder %s29, 0
      %p88 = por %p86, %p87
      %p89 = scmp.ne.s32.totalorder %s75, %s76
      %p90 = scmp.eq.s32.totalorder %s30, 3
      %p91 = por %p89, %p90
      %p93 = scmp.ne.s32.totalorder %s76, %s92
      %p94 = scmp.eq.s32.totalorder %s30, 0
      %p95 = por %p93, %p94
      %s96 = ssub.s32 %s31, %s43
      %p97 = scmp.eq.s32.totalorder %s96, 0
      %s99 = sadd.s32 %s98, 1
      %s100 = scalar_select %p97, %s98, %s99
      %p103 = pneg %p97
      %p104 = scmp.eq.s32.totalorder %s24, 3
      %p105 = por %p103, %p104
      %p106 = scmp.ne.s32.totalorder %s98, %s101
      %p107 = scmp.eq.s32.totalorder %s24, 0
      %p108 = por %p106, %p107
      %p109 = scmp.ne.s32.totalorder %s98, %s101
      %p110 = scmp.eq.s32.totalorder %s29, 3
      %p111 = por %p109, %p110
      %p112 = scmp.ne.s32.totalorder %s101, %s102
      %p113 = scmp.eq.s32.totalorder %s29, 0
      %p114 = por %p112, %p113
      %p115 = scmp.ne.s32.totalorder %s101, %s102
      %p116 = scmp.eq.s32.totalorder %s30, 3
      %p117 = por %p115, %p116
      %p119 = scmp.ne.s32.totalorder %s102, %s118
      %p120 = scmp.eq.s32.totalorder %s30, 0
      %p121 = por %p119, %p120
      %s123 = sadd.s32 %s122, 1
      %p126 = scmp.eq.s32.totalorder %s24, 3
      %p127 = scmp.ne.s32.totalorder %s122, %s124
      %p128 = scmp.eq.s32.totalorder %s24, 0
      %p129 = por %p127, %p128
      %p130 = scmp.ne.s32.totalorder %s122, %s124
      %p131 = scmp.eq.s32.totalorder %s29, 3
      %p132 = por %p130, %p131
      %p133 = scmp.ne.s32.totalorder %s124, %s125
      %p134 = scmp.eq.s32.totalorder %s29, 0
      %p135 = por %p133, %p134
      %p136 = scmp.ne.s32.totalorder %s124, %s125
      %p137 = scmp.eq.s32.totalorder %s30, 3
      %p138 = por %p136, %p137
      %p140 = scmp.ne.s32.totalorder %s125, %s139
      %p141 = scmp.eq.s32.totalorder %s30, 0
      %p142 = por %p140, %p141
      %s143 = ssub.s32 %s31, %s43
      %p144 = scmp.eq.s32.totalorder %s143, 0
      %s146 = sadd.s32 %s145, 1
      %s147 = scalar_select %p144, %s145, %s146
      %p150 = pneg %p144
      %p151 = scmp.eq.s32.totalorder %s24, 3
      %p152 = por %p150, %p151
      %p153 = scmp.ne.s32.totalorder %s145, %s148
      %p154 = scmp.eq.s32.totalorder %s24, 0
      %p155 = por %p153, %p154
      %p156 = scmp.ne.s32.totalorder %s145, %s148
      %p157 = scmp.eq.s32.totalorder %s29, 3
      %p158 = por %p156, %p157
      %p159 = scmp.ne.s32.totalorder %s148, %s149
      %p160 = scmp.eq.s32.totalorder %s29, 0
      %p161 = por %p159, %p160
      %p162 = scmp.ne.s32.totalorder %s148, %s149
      %p163 = scmp.eq.s32.totalorder %s30, 3
      %p164 = por %p162, %p163
      %p166 = scmp.ne.s32.totalorder %s149, %s165
      %p167 = scmp.eq.s32.totalorder %s30, 0
      %p168 = por %p166, %p167
      %p169 = scmp.le.s32.totalorder 1, %s24
      %p170 = scmp.lt.s32.totalorder %s24, 5
      %p171 = pnand %p169, %p170
      %p172 = pneg %p171
      // Predicated region
      $region9: #{tpu_custom_call.1} parent=5 // pred_check
        _
      $region10: #{tpu_custom_call.1} parent=5 // pred_check_branch
        %174 = sbr.rel (%p171) target = $region12
      $region11: #{tpu_custom_call.1} parent=5 // pred_region
        %s175 = ssub.s32 %s24, 1
        // Predicated region
        $region13: #{tpu_custom_call.1} parent=11 // pred_check
          %p176 = pneg %p135
        $region14: #{tpu_custom_call.1} parent=11 // pred_check_branch
          %178 = sbr.rel (%p176) target = $region16
        $region15: #{tpu_custom_call.1} parent=11 // pred_region
          _
        $region16: #{tpu_custom_call.1} parent=11 // pred_fallthru
          _
      $region12: #{tpu_custom_call.1} parent=5 // pred_fallthru
        _
      %p179 = scmp.lt.s32.totalorder %s24, 4
      // Predicated region
      $region17: #{tpu_custom_call.1} parent=5 // pred_check
        %p180 = pneg %p179
      $region18: #{tpu_custom_call.1} parent=5 // pred_check_branch
        %182 = sbr.rel (%p180) target = $region20
      $region19: #{tpu_custom_call.1} parent=5 // pred_region
        // Predicated region
        $region21: #{tpu_custom_call.1} parent=19 // pred_check
          %p183 = pneg %p56
        $region22: #{tpu_custom_call.1} parent=19 // pred_check_branch
          %185 = sbr.rel (%p183) target = $region24
        $region23: #{tpu_custom_call.1} parent=19 // pred_region
          %s186 = smul.u32 2, %s31
          %p187 = scmp.lt.s32.totalorder %s186, 3
          %s188 = scalar_select %p187, %s186, 3
          %s189 = smul.addr %s188, 4
          %s190 = scalar_lea.vmem %s1, %s189
          %s191 = smul.u32 2, %s31
        $region24: #{tpu_custom_call.1} parent=19 // pred_fallthru
          _
        // Predicated region
        $region25: #{tpu_custom_call.1} parent=19 // pred_check
          %p192 = pneg %p82
        $region26: #{tpu_custom_call.1} parent=19 // pred_check_branch
          %194 = sbr.rel (%p192) target = $region28
        $region27: #{tpu_custom_call.1} parent=19 // pred_region
          %s195 = sand.u32 %s72, 1
          %s196 = scalar_lea.sflag [#allocation11], %s195
          %s197 = sand.u32 %s72, 1
          %s198 = smul.addr %s197, 64
          %s199 = scalar_lea.vmem [#allocation10], %s198
          %s200 = smul.u32 16, %s32
          %202 = vsyncadd %s196, 0
          %s203 = smul.addr %s200, 4
          %s204 = scalar_lea.hbm %s2, %s203
          %s205 = sshll.u32 %s204, 4
          %s206 = int_to_ptr.hbm [resolvable:$true] %s205
          %s207 = sshll.u32 %s199, 4
          %s208 = int_to_ptr.vmem [resolvable:$true] %s207
          %213 = dma.hbm_to_vmem [thread:$0]  %s206, 1024, %s208, %s196, 64, 64, 4
        $region28: #{tpu_custom_call.1} parent=19 // pred_fallthru
          _
        // Predicated region
        $region29: #{tpu_custom_call.1} parent=19 // pred_check
          %p214 = pneg %p108
        $region30: #{tpu_custom_call.1} parent=19 // pred_check_branch
          %216 = sbr.rel (%p214) target = $region32
        $region31: #{tpu_custom_call.1} parent=19 // pred_region
          %s217 = smul.u32 2, %s31
          %p218 = scmp.lt.s32.totalorder %s217, 3
          %s219 = scalar_select %p218, %s217, 3
          %s220 = smul.addr %s219, 8
          %s221 = scalar_lea.vmem %s3, %s220
          %s222 = smul.u32 2, %s31
        $region32: #{tpu_custom_call.1} parent=19 // pred_fallthru
          _
      $region20: #{tpu_custom_call.1} parent=5 // pred_fallthru
        _
      %p223 = scmp.le.s32.totalorder 1, %s24
      %p224 = scmp.lt.s32.totalorder %s24, 5
      %p225 = pnand %p223, %p224
      %p226 = pneg %p225
      // Predicated region
      $region33: #{tpu_custom_call.1} parent=5 // pred_check
        _
      $region34: #{tpu_custom_call.1} parent=5 // pred_check_branch
        %228 = sbr.rel (%p225) target = $region36
      $region35: #{tpu_custom_call.1} parent=5 // pred_region
        %s229 = ssub.s32 %s24, 1
        %s230 = sand.u32 %s75, 1
        %s231 = scalar_lea.sflag [#allocation11], %s230
        %s232 = sand.u32 %s75, 1
        %s233 = smul.addr %s232, 64
        %s234 = scalar_lea.vmem [#allocation10], %s233
        // Predicated region
        $region37: #{tpu_custom_call.1} parent=35 // pred_check
          %p235 = pneg %p88
        $region38: #{tpu_custom_call.1} parent=35 // pred_check_branch
          %237 = sbr.rel (%p235) target = $region40
        $region39: #{tpu_custom_call.1} parent=35 // pred_region
          %239 = dma.done %s231, 1024
        $region40: #{tpu_custom_call.1} parent=35 // pred_fallthru
          _
        %s240 = smul.u32 2, %s33
        %p241 = scmp.lt.s32.totalorder %s240, 3
        %s242 = scalar_select %p241, %s240, 3
        %s243 = smul.addr %s242, 4
        %s244 = scalar_lea.vmem %s1, %s243
        %p245 = pneg %p62
        %p246 = pneg %p59
        %s247 = sand.u32 %s75, 1
        %s248 = scalar_lea.sflag [#allocation11], %s247
        %s249 = sand.u32 %s75, 1
        %s250 = smul.addr %s249, 64
        %s251 = scalar_lea.vmem [#allocation10], %s250
        %p252 = pneg %p88
        %p253 = pneg %p85
        %s254 = smul.u32 2, %s33
        %p255 = scmp.lt.s32.totalorder %s254, 3
        %s256 = scalar_select %p255, %s254, 3
        %s257 = smul.addr %s256, 8
        %s258 = scalar_lea.vmem %s3, %s257
        %p259 = pneg %p114
        %p260 = pneg %p111
        %p261 = pneg %p135
        %p262 = pneg %p132
        %p263 = pneg %p161
        %p264 = pneg %p158
        %s265 = smul.u32 2, %s33
        %p266 = scmp.lt.s32.totalorder %s265, 3
        %s267 = scalar_select %p266, %s265, 3
        %s268 = smul.addr %s267, 8
        %s269 = scalar_lea.vmem %s6, %s268
        %s270 = smul.u32 2, %s33
        %p271 = scmp.lt.s32.totalorder %s270, 3
        %s272 = scalar_select %p271, %s270, 3
        %s273 = smul.addr %s272, 4
        %s274 = scalar_lea.vmem %s1, %s273
        %s275 = smul.u32 2, %s33
        %s276 = smul.u32 16, %s34
        %s277 = smul.u32 2, %s33
        %p278 = scmp.lt.s32.totalorder %s277, 3
        %s279 = scalar_select %p278, %s277, 3
        %s280 = smul.addr %s279, 8
        %s281 = scalar_lea.vmem %s3, %s280
        %s282 = smul.u32 2, %s33
        %s283 = smul.u32 2, %s33
        %p284 = scmp.lt.s32.totalorder %s283, 3
        %s285 = scalar_select %p284, %s283, 3
        %s286 = smul.addr %s285, 8
        %s287 = scalar_lea.vmem %s6, %s286
        %s288 = smul.u32 2, %s33
        %s289 = sld [smem:[#allocation9]]
        %s290 = smul.u32 %s34, 128
        %s291 = smul.u32 %s33, 16
        %s292 = sld [smem:[#allocation8 + %s291]]
        %s293 = sshrl.u32 %s292, 3
        %s294 = sand.u32 %s292, 7
        %s295 = smul.u32 %s293, 16
        %s296 = sadd.s32 %s294, %s295
        %s297 = sshra.s32 %s290, 7
        %s298 = sand.u32 %s290, 127
        %s299 = smul.u32 %s297, 8
        %s300 = sadd.s32 %s299, %s296
        %s301 = scalar_lea.hbm %s5, %s300
        // Predicated region
        $region41: #{tpu_custom_call.1} parent=35 // pred_check
          _
        $region42: #{tpu_custom_call.1} parent=35 // pred_check_branch
          %303 = sbr.rel target = $region44
        $region43: #{tpu_custom_call.1} parent=35 // pred_region
          %304 = sst [smem:[#allocation14]] [#allocation13]
          %305 = sst [smem:[#allocation15]] [#allocation12]
        $region44: #{tpu_custom_call.1} parent=35 // pred_fallthru
          _
        %307 = shalt.err (0)
        %s309 = sshll.u32 %s301, 4
        %s310 = int_to_ptr.hbm [resolvable:$true] %s309
        %s311 = sshll.u32 [#allocation2], 4
        %s312 = int_to_ptr.vmem [resolvable:$true] %s311
        %314 = dma.hbm_to_vmem [thread:$0]  %s310, 16, %s312, [#allocation3]
        %s315 = sadd.s32 %s291, 1
        %s316 = sld [smem:[#allocation8 + %s315]]
        %s317 = sshrl.u32 %s316, 3
        %s318 = sand.u32 %s316, 7
        %s319 = smul.u32 %s317, 16
        %s320 = sadd.s32 %s318, %s319
        %s321 = sadd.s32 %s299, %s320
        %s322 = scalar_lea.hbm %s5, %s321
        %s323 = scalar_lea.vmem [#allocation2], 1
        %s324 = scalar_lea.sflag [#allocation3], 1
        // Predicated region
        $region45: #{tpu_custom_call.1} parent=35 // pred_check
          _
        $region46: #{tpu_custom_call.1} parent=35 // pred_check_branch
          %326 = sbr.rel target = $region48
        $region47: #{tpu_custom_call.1} parent=35 // pred_region
          %327 = sst [smem:[#allocation14]] [#allocation17]
          %328 = sst [smem:[#allocation15]] [#allocation16]
        $region48: #{tpu_custom_call.1} parent=35 // pred_fallthru
          _
        %330 = shalt.err (0)
        %s332 = sshll.u32 %s322, 4
        %s333 = int_to_ptr.hbm [resolvable:$true] %s332
        %s334 = sshll.u32 %s323, 4
        %s335 = int_to_ptr.vmem [resolvable:$true] %s334
        %337 = dma.hbm_to_vmem [thread:$0]  %s333, 16, %s335, %s324
        %s338 = sadd.s32 %s291, 2
        %s339 = sld [smem:[#allocation8 + %s338]]
        %s340 = sshrl.u32 %s339, 3
        %s341 = sand.u32 %s339, 7
        %s342 = smul.u32 %s340, 16
        %s343 = sadd.s32 %s341, %s342
        %s344 = sadd.s32 %s299, %s343
        %s345 = scalar_lea.hbm %s5, %s344
        %s346 = scalar_lea.vmem [#allocation2], 2
        %s347 = scalar_lea.sflag [#allocation3], 2
        // Predicated region
        $region49: #{tpu_custom_call.1} parent=35 // pred_check
          _
        $region50: #{tpu_custom_call.1} parent=35 // pred_check_branch
          %349 = sbr.rel target = $region52
        $region51: #{tpu_custom_call.1} parent=35 // pred_region
          %350 = sst [smem:[#allocation14]] [#allocation19]
          %351 = sst [smem:[#allocation15]] [#allocation18]
        $region52: #{tpu_custom_call.1} parent=35 // pred_fallthru
          _
        %353 = shalt.err (0)
        %s355 = sshll.u32 %s345, 4
        %s356 = int_to_ptr.hbm [resolvable:$true] %s355
        %s357 = sshll.u32 %s346, 4
        %s358 = int_to_ptr.vmem [resolvable:$true] %s357
        %360 = dma.hbm_to_vmem [thread:$0]  %s356, 16, %s358, %s347
        %s361 = sadd.s32 %s291, 3
        %s362 = sld [smem:[#allocation8 + %s361]]
        %s363 = sshrl.u32 %s362, 3
        %s364 = sand.u32 %s362, 7
        %s365 = smul.u32 %s363, 16
        %s366 = sadd.s32 %s364, %s365
        %s367 = sadd.s32 %s299, %s366
        %s368 = scalar_lea.hbm %s5, %s367
        %s369 = scalar_lea.vmem [#allocation2], 3
        %s370 = scalar_lea.sflag [#allocation3], 3
        // Predicated region
        $region53: #{tpu_custom_call.1} parent=35 // pred_check
          _
        $region54: #{tpu_custom_call.1} parent=35 // pred_check_branch
          %372 = sbr.rel target = $region56
        $region55: #{tpu_custom_call.1} parent=35 // pred_region
          %373 = sst [smem:[#allocation14]] [#allocation21]
          %374 = sst [smem:[#allocation15]] [#allocation20]
        $region56: #{tpu_custom_call.1} parent=35 // pred_fallthru
          _
        %376 = shalt.err (0)
        %s378 = sshll.u32 %s368, 4
        %s379 = int_to_ptr.hbm [resolvable:$true] %s378
        %s380 = sshll.u32 %s369, 4
        %s381 = int_to_ptr.vmem [resolvable:$true] %s380
        %383 = dma.hbm_to_vmem [thread:$0]  %s379, 16, %s381, %s370
        %s384 = sadd.s32 %s291, 4
        %s385 = sld [smem:[#allocation8 + %s384]]
        %s386 = sshrl.u32 %s385, 3
        %s387 = sand.u32 %s385, 7
        %s388 = smul.u32 %s386, 16
        %s389 = sadd.s32 %s387, %s388
        %s390 = sadd.s32 %s299, %s389
        %s391 = scalar_lea.hbm %s5, %s390
        %s392 = scalar_lea.vmem [#allocation2], 4
        %s393 = scalar_lea.sflag [#allocation3], 4
        // Predicated region
        $region57: #{tpu_custom_call.1} parent=35 // pred_check
          _
        $region58: #{tpu_custom_call.1} parent=35 // pred_check_branch
          %395 = sbr.rel target = $region60
        $region59: #{tpu_custom_call.1} parent=35 // pred_region
          %396 = sst [smem:[#allocation14]] [#allocation23]
          %397 = sst [smem:[#allocation15]] [#allocation22]
        $region60: #{tpu_custom_call.1} parent=35 // pred_fallthru
          _
        %399 = shalt.err (0)
        %s401 = sshll.u32 %s391, 4
        %s402 = int_to_ptr.hbm [resolvable:$true] %s401
        %s403 = sshll.u32 %s392, 4
        %s404 = int_to_ptr.vmem [resolvable:$true] %s403
        %406 = dma.hbm_to_vmem [thread:$0]  %s402, 16, %s404, %s393
        %s407 = sadd.s32 %s291, 5
        %s408 = sld [smem:[#allocation8 + %s407]]
        %s409 = sshrl.u32 %s408, 3
        %s410 = sand.u32 %s408, 7
        %s411 = smul.u32 %s409, 16
        %s412 = sadd.s32 %s410, %s411
        %s413 = sadd.s32 %s299, %s412
        %s414 = scalar_lea.hbm %s5, %s413
        %s415 = scalar_lea.vmem [#allocation2], 5
        %s416 = scalar_lea.sflag [#allocation3], 5
        // Predicated region
        $region61: #{tpu_custom_call.1} parent=35 // pred_check
          _
        $region62: #{tpu_custom_call.1} parent=35 // pred_check_branch
          %418 = sbr.rel target = $region64
        $region63: #{tpu_custom_call.1} parent=35 // pred_region
          %419 = sst [smem:[#allocation14]] [#allocation25]
          %420 = sst [smem:[#allocation15]] [#allocation24]
        $region64: #{tpu_custom_call.1} parent=35 // pred_fallthru
          _
        %422 = shalt.err (0)
        %s424 = sshll.u32 %s414, 4
        %s425 = int_to_ptr.hbm [resolvable:$true] %s424
        %s426 = sshll.u32 %s415, 4
        %s427 = int_to_ptr.vmem [resolvable:$true] %s426
        %429 = dma.hbm_to_vmem [thread:$0]  %s425, 16, %s427, %s416
        %s430 = sadd.s32 %s291, 6
        %s431 = sld [smem:[#allocation8 + %s430]]
        %s432 = sshrl.u32 %s431, 3
        %s433 = sand.u32 %s431, 7
        %s434 = smul.u32 %s432, 16
        %s435 = sadd.s32 %s433, %s434
        %s436 = sadd.s32 %s299, %s435
        %s437 = scalar_lea.hbm %s5, %s436
        %s438 = scalar_lea.vmem [#allocation2], 6
        %s439 = scalar_lea.sflag [#allocation3], 6
        // Predicated region
        $region65: #{tpu_custom_call.1} parent=35 // pred_check
          _
        $region66: #{tpu_custom_call.1} parent=35 // pred_check_branch
          %441 = sbr.rel target = $region68
        $region67: #{tpu_custom_call.1} parent=35 // pred_region
          %442 = sst [smem:[#allocation14]] [#allocation27]
          %443 = sst [smem:[#allocation15]] [#allocation26]
        $region68: #{tpu_custom_call.1} parent=35 // pred_fallthru
          _
        %445 = shalt.err (0)
        %s447 = sshll.u32 %s437, 4
        %s448 = int_to_ptr.hbm [resolvable:$true] %s447
        %s449 = sshll.u32 %s438, 4
        %s450 = int_to_ptr.vmem [resolvable:$true] %s449
        %452 = dma.hbm_to_vmem [thread:$0]  %s448, 16, %s450, %s439
        %s453 = sadd.s32 %s291, 7
        %s454 = sld [smem:[#allocation8 + %s453]]
        %s455 = sshrl.u32 %s454, 3
        %s456 = sand.u32 %s454, 7
        %s457 = smul.u32 %s455, 16
        %s458 = sadd.s32 %s456, %s457
        %s459 = sadd.s32 %s299, %s458
        %s460 = scalar_lea.hbm %s5, %s459
        %s461 = scalar_lea.vmem [#allocation2], 7
        %s462 = scalar_lea.sflag [#allocation3], 7
        // Predicated region
        $region69: #{tpu_custom_call.1} parent=35 // pred_check
          _
        $region70: #{tpu_custom_call.1} parent=35 // pred_check_branch
          %464 = sbr.rel target = $region72
        $region71: #{tpu_custom_call.1} parent=35 // pred_region
          %465 = sst [smem:[#allocation14]] [#allocation29]
          %466 = sst [smem:[#allocation15]] [#allocation28]
        $region72: #{tpu_custom_call.1} parent=35 // pred_fallthru
          _
        %468 = shalt.err (0)
        %s470 = sshll.u32 %s460, 4
        %s471 = int_to_ptr.hbm [resolvable:$true] %s470
        %s472 = sshll.u32 %s461, 4
        %s473 = int_to_ptr.vmem [resolvable:$true] %s472
        %475 = dma.hbm_to_vmem [thread:$0]  %s471, 16, %s473, %s462
        %s476 = sadd.s32 %s291, 8
        %s477 = sld [smem:[#allocation8 + %s476]]
        %s478 = sshrl.u32 %s477, 3
        %s479 = sand.u32 %s477, 7
        %s480 = smul.u32 %s478, 16
        %s481 = sadd.s32 %s479, %s480
        %s482 = sadd.s32 %s299, %s481
        %s483 = scalar_lea.hbm %s5, %s482
        %s484 = scalar_lea.vmem [#allocation2], 8
        %s485 = scalar_lea.sflag [#allocation3], 8
        // Predicated region
        $region73: #{tpu_custom_call.1} parent=35 // pred_check
          _
        $region74: #{tpu_custom_call.1} parent=35 // pred_check_branch
          %487 = sbr.rel target = $region76
        $region75: #{tpu_custom_call.1} parent=35 // pred_region
          %488 = sst [smem:[#allocation14]] [#allocation31]
          %489 = sst [smem:[#allocation15]] [#allocation30]
        $region76: #{tpu_custom_call.1} parent=35 // pred_fallthru
          _
        %491 = shalt.err (0)
        %s493 = sshll.u32 %s483, 4
        %s494 = int_to_ptr.hbm [resolvable:$true] %s493
        %s495 = sshll.u32 %s484, 4
        %s496 = int_to_ptr.vmem [resolvable:$true] %s495
        %498 = dma.hbm_to_vmem [thread:$0]  %s494, 16, %s496, %s485
        %s499 = sadd.s32 %s291, 9
        %s500 = sld [smem:[#allocation8 + %s499]]
        %s501 = sshrl.u32 %s500, 3
        %s502 = sand.u32 %s500, 7
        %s503 = smul.u32 %s501, 16
        %s504 = sadd.s32 %s502, %s503
        %s505 = sadd.s32 %s299, %s504
        %s506 = scalar_lea.hbm %s5, %s505
        %s507 = scalar_lea.vmem [#allocation2], 9
        %s508 = scalar_lea.sflag [#allocation3], 9
        // Predicated region
        $region77: #{tpu_custom_call.1} parent=35 // pred_check
          _
        $region78: #{tpu_custom_call.1} parent=35 // pred_check_branch
          %510 = sbr.rel target = $region80
        $region79: #{tpu_custom_call.1} parent=35 // pred_region
          %511 = sst [smem:[#allocation14]] [#allocation33]
          %512 = sst [smem:[#allocation15]] [#allocation32]
        $region80: #{tpu_custom_call.1} parent=35 // pred_fallthru
          _
        %514 = shalt.err (0)
        %s516 = sshll.u32 %s506, 4
        %s517 = int_to_ptr.hbm [resolvable:$true] %s516
        %s518 = sshll.u32 %s507, 4
        %s519 = int_to_ptr.vmem [resolvable:$true] %s518
        %521 = dma.hbm_to_vmem [thread:$0]  %s517, 16, %s519, %s508
        %s522 = sadd.s32 %s291, 10
        %s523 = sld [smem:[#allocation8 + %s522]]
        %s524 = sshrl.u32 %s523, 3
        %s525 = sand.u32 %s523, 7
        %s526 = smul.u32 %s524, 16
        %s527 = sadd.s32 %s525, %s526
        %s528 = sadd.s32 %s299, %s527
        %s529 = scalar_lea.hbm %s5, %s528
        %s530 = scalar_lea.vmem [#allocation2], 10
        %s531 = scalar_lea.sflag [#allocation3], 10
        // Predicated region
        $region81: #{tpu_custom_call.1} parent=35 // pred_check
          _
        $region82: #{tpu_custom_call.1} parent=35 // pred_check_branch
          %533 = sbr.rel target = $region84
        $region83: #{tpu_custom_call.1} parent=35 // pred_region
          %534 = sst [smem:[#allocation14]] [#allocation35]
          %535 = sst [smem:[#allocation15]] [#allocation34]
        $region84: #{tpu_custom_call.1} parent=35 // pred_fallthru
          _
        %537 = shalt.err (0)
        %s539 = sshll.u32 %s529, 4
        %s540 = int_to_ptr.hbm [resolvable:$true] %s539
        %s541 = sshll.u32 %s530, 4
        %s542 = int_to_ptr.vmem [resolvable:$true] %s541
        %544 = dma.hbm_to_vmem [thread:$0]  %s540, 16, %s542, %s531
        %s545 = sadd.s32 %s291, 11
        %s546 = sld [smem:[#allocation8 + %s545]]
        %s547 = sshrl.u32 %s546, 3
        %s548 = sand.u32 %s546, 7
        %s549 = smul.u32 %s547, 16
        %s550 = sadd.s32 %s548, %s549
        %s551 = sadd.s32 %s299, %s550
        %s552 = scalar_lea.hbm %s5, %s551
        %s553 = scalar_lea.vmem [#allocation2], 11
        %s554 = scalar_lea.sflag [#allocation3], 11
        // Predicated region
        $region85: #{tpu_custom_call.1} parent=35 // pred_check
          _
        $region86: #{tpu_custom_call.1} parent=35 // pred_check_branch
          %556 = sbr.rel target = $region88
        $region87: #{tpu_custom_call.1} parent=35 // pred_region
          %557 = sst [smem:[#allocation14]] [#allocation37]
          %558 = sst [smem:[#allocation15]] [#allocation36]
        $region88: #{tpu_custom_call.1} parent=35 // pred_fallthru
          _
        %560 = shalt.err (0)
        %s562 = sshll.u32 %s552, 4
        %s563 = int_to_ptr.hbm [resolvable:$true] %s562
        %s564 = sshll.u32 %s553, 4
        %s565 = int_to_ptr.vmem [resolvable:$true] %s564
        %567 = dma.hbm_to_vmem [thread:$0]  %s563, 16, %s565, %s554
        %s568 = sadd.s32 %s291, 12
        %s569 = sld [smem:[#allocation8 + %s568]]
        %s570 = sshrl.u32 %s569, 3
        %s571 = sand.u32 %s569, 7
        %s572 = smul.u32 %s570, 16
        %s573 = sadd.s32 %s571, %s572
        %s574 = sadd.s32 %s299, %s573
        %s575 = scalar_lea.hbm %s5, %s574
        %s576 = scalar_lea.vmem [#allocation2], 12
        %s577 = scalar_lea.sflag [#allocation3], 12
        // Predicated region
        $region89: #{tpu_custom_call.1} parent=35 // pred_check
          _
        $region90: #{tpu_custom_call.1} parent=35 // pred_check_branch
          %579 = sbr.rel target = $region92
        $region91: #{tpu_custom_call.1} parent=35 // pred_region
          %580 = sst [smem:[#allocation14]] [#allocation39]
          %581 = sst [smem:[#allocation15]] [#allocation38]
        $region92: #{tpu_custom_call.1} parent=35 // pred_fallthru
          _
        %583 = shalt.err (0)
        %s585 = sshll.u32 %s575, 4
        %s586 = int_to_ptr.hbm [resolvable:$true] %s585
        %s587 = sshll.u32 %s576, 4
        %s588 = int_to_ptr.vmem [resolvable:$true] %s587
        %590 = dma.hbm_to_vmem [thread:$0]  %s586, 16, %s588, %s577
        %s591 = sadd.s32 %s291, 13
        %s592 = sld [smem:[#allocation8 + %s591]]
        %s593 = sshrl.u32 %s592, 3
        %s594 = sand.u32 %s592, 7
        %s595 = smul.u32 %s593, 16
        %s596 = sadd.s32 %s594, %s595
        %s597 = sadd.s32 %s299, %s596
        %s598 = scalar_lea.hbm %s5, %s597
        %s599 = scalar_lea.vmem [#allocation2], 13
        %s600 = scalar_lea.sflag [#allocation3], 13
        // Predicated region
        $region93: #{tpu_custom_call.1} parent=35 // pred_check
          _
        $region94: #{tpu_custom_call.1} parent=35 // pred_check_branch
          %602 = sbr.rel target = $region96
        $region95: #{tpu_custom_call.1} parent=35 // pred_region
          %603 = sst [smem:[#allocation14]] [#allocation41]
          %604 = sst [smem:[#allocation15]] [#allocation40]
        $region96: #{tpu_custom_call.1} parent=35 // pred_fallthru
          _
        %606 = shalt.err (0)
        %s608 = sshll.u32 %s598, 4
        %s609 = int_to_ptr.hbm [resolvable:$true] %s608
        %s610 = sshll.u32 %s599, 4
        %s611 = int_to_ptr.vmem [resolvable:$true] %s610
        %613 = dma.hbm_to_vmem [thread:$0]  %s609, 16, %s611, %s600
        %s614 = sadd.s32 %s291, 14
        %s615 = sld [smem:[#allocation8 + %s614]]
        %s616 = sshrl.u32 %s615, 3
        %s617 = sand.u32 %s615, 7
        %s618 = smul.u32 %s616, 16
        %s619 = sadd.s32 %s617, %s618
        %s620 = sadd.s32 %s299, %s619
        %s621 = scalar_lea.hbm %s5, %s620
        %s622 = scalar_lea.vmem [#allocation2], 14
        %s623 = scalar_lea.sflag [#allocation3], 14
        // Predicated region
        $region97: #{tpu_custom_call.1} parent=35 // pred_check
          _
        $region98: #{tpu_custom_call.1} parent=35 // pred_check_branch
          %625 = sbr.rel target = $region100
        $region99: #{tpu_custom_call.1} parent=35 // pred_region
          %626 = sst [smem:[#allocation14]] [#allocation43]
          %627 = sst [smem:[#allocation15]] [#allocation42]
        $region100: #{tpu_custom_call.1} parent=35 // pred_fallthru
          _
        %629 = shalt.err (0)
        %s631 = sshll.u32 %s621, 4
        %s632 = int_to_ptr.hbm [resolvable:$true] %s631
        %s633 = sshll.u32 %s622, 4
        %s634 = int_to_ptr.vmem [resolvable:$true] %s633
        %636 = dma.hbm_to_vmem [thread:$0]  %s632, 16, %s634, %s623
        %s637 = sadd.s32 %s291, 15
        %s638 = sld [smem:[#allocation8 + %s637]]
        %s639 = sshrl.u32 %s638, 3
        %s640 = sand.u32 %s638, 7
        %s641 = smul.u32 %s639, 16
        %s642 = sadd.s32 %s640, %s641
        %s643 = sadd.s32 %s299, %s642
        %s644 = scalar_lea.hbm %s5, %s643
        %s645 = scalar_lea.vmem [#allocation2], 15
        %s646 = scalar_lea.sflag [#allocation3], 15
        // Predicated region
        $region101: #{tpu_custom_call.1} parent=35 // pred_check
          _
        $region102: #{tpu_custom_call.1} parent=35 // pred_check_branch
          %648 = sbr.rel target = $region104
        $region103: #{tpu_custom_call.1} parent=35 // pred_region
          %649 = sst [smem:[#allocation14]] [#allocation45]
          %650 = sst [smem:[#allocation15]] [#allocation44]
        $region104: #{tpu_custom_call.1} parent=35 // pred_fallthru
          _
        %652 = shalt.err (0)
        %s654 = sshll.u32 %s644, 4
        %s655 = int_to_ptr.hbm [resolvable:$true] %s654
        %s656 = sshll.u32 %s645, 4
        %s657 = int_to_ptr.vmem [resolvable:$true] %s656
        %659 = dma.hbm_to_vmem [thread:$0]  %s655, 16, %s657, %s646
        %p660 = scmp.eq.s32.totalorder %s34, 0
        // Predicated region
        $region105: #{tpu_custom_call.1} parent=35 // pred_check
          %p661 = pneg %p660
        $region106: #{tpu_custom_call.1} parent=35 // pred_check_branch
          %663 = sbr.rel (%p661) target = $region108
        $region107: #{tpu_custom_call.1} parent=35 // pred_region
          %vm664 = vcmask 7168
          %665 = vst.msk [vmem:[#allocation4] sm:$0xff] %vm664, -1e+30
          %666 = vst.msk [vmem:[#allocation4 + $0x8] sm:$0xff] %vm664, -1e+30
          %667 = vst.msk [vmem:[#allocation5] sm:$0xff] %vm664, 0.0
          %668 = vst.msk [vmem:[#allocation5 + $0x8] sm:$0xff] %vm664, 0.0
          %669 = vst.msk [vmem:[#allocation6] sm:$0xff] %vm664, 0.0
          %670 = vst.msk [vmem:[#allocation6 + $0x8] sm:$0xff] %vm664, 0.0
        $region108: #{tpu_custom_call.1} parent=35 // pred_fallthru
          _
        %v671 = vld [vmem:[%s274] sm:$0xf]
        %v672 = vld [vmem:[%s274 + $0x4] sm:$0xf]
        %v673 = vld [vmem:[%s234] sm:$0xf]
        %v674 = vld [vmem:[%s234 + $0x4] sm:$0xf]
        %v675 = vld [vmem:[%s234 + $0x8] sm:$0xf]
        %v676 = vld [vmem:[%s234 + $0xc] sm:$0xf]
        %v677 = vld [vmem:[%s234 + $0x10] sm:$0xf]
        %v678 = vld [vmem:[%s234 + $0x14] sm:$0xf]
        %v679 = vld [vmem:[%s234 + $0x18] sm:$0xf]
        %v680 = vld [vmem:[%s234 + $0x1c] sm:$0xf]
        %v681 = vld [vmem:[%s234 + $0x20] sm:$0xf]
        %v682 = vld [vmem:[%s234 + $0x24] sm:$0xf]
        %v683 = vld [vmem:[%s234 + $0x28] sm:$0xf]
        %v684 = vld [vmem:[%s234 + $0x2c] sm:$0xf]
        %v685 = vld [vmem:[%s234 + $0x30] sm:$0xf]
        %v686 = vld [vmem:[%s234 + $0x34] sm:$0xf]
        %v687 = vld [vmem:[%s234 + $0x38] sm:$0xf]
        %v688 = vld [vmem:[%s234 + $0x3c] sm:$0xf]
        %s689 = smul.u32 1, 1
        %s690 = sshll.u32 %s689, 4
        %691 = dma.done [#allocation3], %s690
        %s692 = sshll.u32 %s689, 4
        %693 = dma.done %s324, %s692
        %s694 = sshll.u32 %s689, 4
        %695 = dma.done %s347, %s694
        %s696 = sshll.u32 %s689, 4
        %697 = dma.done %s370, %s696
        %s698 = sshll.u32 %s689, 4
        %699 = dma.done %s393, %s698
        %s700 = sshll.u32 %s689, 4
        %701 = dma.done %s416, %s700
        %s702 = sshll.u32 %s689, 4
        %703 = dma.done %s439, %s702
        %s704 = sshll.u32 %s689, 4
        %705 = dma.done %s462, %s704
        %s706 = sshll.u32 %s689, 4
        %707 = dma.done %s485, %s706
        %s708 = sshll.u32 %s689, 4
        %709 = dma.done %s508, %s708
        %s710 = sshll.u32 %s689, 4
        %711 = dma.done %s531, %s710
        %s712 = sshll.u32 %s689, 4
        %713 = dma.done %s554, %s712
        %s714 = sshll.u32 %s689, 4
        %715 = dma.done %s577, %s714
        %s716 = sshll.u32 %s689, 4
        %717 = dma.done %s600, %s716
        %s718 = sshll.u32 %s689, 4
        %719 = dma.done %s623, %s718
        %s720 = sshll.u32 %s689, 4
        %721 = dma.done %s646, %s720
        %v722 = vld [vmem:[#allocation2] sm:$0xff]
        %v723 = vld [vmem:[#allocation2 + $0x8] sm:$0xff]
        %v726 = vunpack.c.l.b16 %v671
        %v727 = vunpack.c.l.b16 %v672
        %v728 = vpack.c.b16 %v727, %v726
        %v746 = vunpack.c.l.b16 %v673
        %v747 = vunpack.c.l.b16 %v674
        %v748 = vunpack.c.l.b16 %v675
        %v749 = vunpack.c.l.b16 %v676
        %v750 = vunpack.c.l.b16 %v677
        %v751 = vunpack.c.l.b16 %v678
        %v752 = vunpack.c.l.b16 %v679
        %v753 = vunpack.c.l.b16 %v680
        %v754 = vunpack.c.l.b16 %v681
        %v755 = vunpack.c.l.b16 %v682
        %v756 = vunpack.c.l.b16 %v683
        %v757 = vunpack.c.l.b16 %v684
        %v758 = vunpack.c.l.b16 %v685
        %v759 = vunpack.c.l.b16 %v686
        %v760 = vunpack.c.l.b16 %v687
        %v761 = vunpack.c.l.b16 %v688
        %v762 = vpack.c.b16 %v747, %v746
        %v763 = vpack.c.b16 %v749, %v748
        %v764 = vpack.c.b16 %v751, %v750
        %v765 = vpack.c.b16 %v753, %v752
        %v766 = vpack.c.b16 %v755, %v754
        %v767 = vpack.c.b16 %v757, %v756
        %v768 = vpack.c.b16 %v759, %v758
        %v769 = vpack.c.b16 %v761, %v760
        %778 = vmatpush.bf16.xpose.msra.mxu0 %v769
        %779 = vmatpush.bf16.xpose.msra.mxu0 %v768
        %780 = vmatpush.bf16.xpose.msra.mxu0 %v767
        %781 = vmatpush.bf16.xpose.msra.mxu0 %v766
        %782 = vmatpush.bf16.xpose.msra.mxu0 %v765
        %783 = vmatpush.bf16.xpose.msra.mxu0 %v764
        %784 = vmatpush.bf16.xpose.msra.mxu0 %v763
        %785 = vmatpush.bf16.xpose.msra.mxu0 %v762
        %786 = vmatmul.bf16.gmra.mxu0 %v728
        %v787 = vpop.f32.mrf.mxu0
        %v788 = vadd.f32 %v722, %v787
        %v789 = vpop.f32.mrf.mxu0
        %v790 = vadd.f32 %v723, %v789
        %791 = vdwg.mxu0
        %v792 = vstv %s289
        %v793 = vmul.f32 %v788, %v792
        %v794 = vmul.f32 %v790, %v792
        %v795 = vlaneseq
        %v796 = vand.u32 %v795, 127
        %v797 = vstv %s290
        %v798 = vadd.s32 %v796, %v797
        %vm799 = vcmp.lt.s32.totalorder %v798, 200
        %v800 = vsel %vm799, %v793, -1e+30
        %v801 = vsel %vm799, %v794, -1e+30
        %v802 = vld [vmem:[#allocation4] sm:$0xff]
        %v803 = vld [vmem:[#allocation4 + $0x8] sm:$0xff]
        %804 = vmax.xlane.f32.xlu0 %v800
        %v805 = vpop.xlane.xlu0 %804
        %806 = vmax.xlane.f32.xlu0 %v801
        %v807 = vpop.xlane.xlu0 %806
        %v808 = vmax.f32 %v802, %v805
        %v809 = vmax.f32 %v803, %v807
        %v810 = vsub.f32 %v802, %v808
        %v811 = vsub.f32 %v803, %v809
        %v812 = vmul.f32 %v810, 1.442695
        %v813 = vpow.pop %v812
        %v814 = vmul.f32 %v811, 1.442695
        %v815 = vpow.pop %v814
        %817 = vset.pattern.permute.xlu0 0
        %818 = vperm.xlu0 %817, %v808
        %v819 = vpop.permute.xlu0 %818
        %822 = vset.pattern.permute.xlu0 0
        %823 = vperm.xlu0 %822, %v809
        %v824 = vpop.permute.xlu0 %823
        %v826 = vsub.f32 %v800, %v819
        %v827 = vsub.f32 %v801, %v824
        %v828 = vmul.f32 %v826, 1.442695
        %v829 = vpow.pop %v828
        %v830 = vmul.f32 %v827, 1.442695
        %v831 = vpow.pop %v830
        %v832 = vld [vmem:[#allocation5] sm:$0xff]
        %v833 = vld [vmem:[#allocation5 + $0x8] sm:$0xff]
        %v834 = vmul.f32 %v813, %v832
        %v835 = vmul.f32 %v815, %v833
        %836 = vadd.xlane.f32.xlu0 %v829
        %v837 = vpop.xlane.xlu0 %836
        %838 = vadd.xlane.f32.xlu0 %v831
        %v839 = vpop.xlane.xlu0 %838
        %v840 = vadd.f32 %v834, %v837
        %v841 = vadd.f32 %v835, %v839
        %vm842 = vcmask 7168
        %843 = vst.msk [vmem:[#allocation5] sm:$0xff] %vm842, %v840
        %844 = vst.msk [vmem:[#allocation5 + $0x8] sm:$0xff] %vm842, %v841
        %845 = vst.msk [vmem:[#allocation4] sm:$0xff] %vm842, %v808
        %846 = vst.msk [vmem:[#allocation4 + $0x8] sm:$0xff] %vm842, %v809
        %v847 = vld [vmem:[%s281] sm:$0xff]
        %v848 = vld [vmem:[%s281 + $0x8] sm:$0xff]
        %849 = vset.pattern.permute.xlu0 0
        %850 = vperm.xlu0 %849, %v847
        %v851 = vpop.permute.xlu0 %850
        %852 = vset.pattern.permute.xlu0 0
        %853 = vperm.xlu0 %852, %v848
        %v854 = vpop.permute.xlu0 %853
        %vm855 = vcmp.eq.s32.totalorder %v798, %v851
        %vm856 = vcmp.eq.s32.totalorder %v798, %v854
        %v857 = vld [vmem:[#allocation6] sm:$0xff]
        %v858 = vld [vmem:[#allocation6 + $0x8] sm:$0xff]
        %v859 = vsel %vm855, %v800, 0.0
        %v860 = vsel %vm856, %v801, 0.0
        %861 = vadd.xlane.f32.xlu0 %v859
        %v862 = vpop.xlane.xlu0 %861
        %863 = vadd.xlane.f32.xlu0 %v860
        %v864 = vpop.xlane.xlu0 %863
        %v865 = vadd.f32 %v857, %v862
        %v866 = vadd.f32 %v858, %v864
        %867 = vst.msk [vmem:[#allocation6] sm:$0xff] %vm842, %v865
        %868 = vst.msk [vmem:[#allocation6 + $0x8] sm:$0xff] %vm842, %v866
        %p869 = scmp.eq.s32.totalorder %s34, 1
        // Predicated region
        $region109: #{tpu_custom_call.1} parent=35 // pred_check
          %p870 = pneg %p869
        $region110: #{tpu_custom_call.1} parent=35 // pred_check_branch
          %872 = sbr.rel (%p870) target = $region112
        $region111: #{tpu_custom_call.1} parent=35 // pred_region
          %v873 = vld [vmem:[#allocation4] sm:$0xff]
          %v874 = vld [vmem:[#allocation4 + $0x8] sm:$0xff]
          %v875 = vld [vmem:[#allocation5] sm:$0xff]
          %v876 = vld [vmem:[#allocation5 + $0x8] sm:$0xff]
          %v877 = vlog2.pop %v875
          %v878 = vmul.f32 %v877, 0.6931472
          %v879 = vlog2.pop %v876
          %v880 = vmul.f32 %v879, 0.6931472
          %v881 = vadd.f32 %v873, %v878
          %v882 = vadd.f32 %v874, %v880
          %v883 = vld [vmem:[#allocation6] sm:$0xff]
          %v884 = vld [vmem:[#allocation6 + $0x8] sm:$0xff]
          %v885 = vsub.f32 %v881, %v883
          %v886 = vsub.f32 %v882, %v884
          %887 = vst.msk [vmem:[%s287] sm:$0xff] %vm842, %v885
          %888 = vst.msk [vmem:[%s287 + $0x8] sm:$0xff] %vm842, %v886
        $region112: #{tpu_custom_call.1} parent=35 // pred_fallthru
          _
        %s889 = smul.u32 2, %s33
        %p890 = scmp.lt.s32.totalorder %s889, 3
        %s891 = scalar_select %p890, %s889, 3
        %s892 = smul.addr %s891, 8
        %s893 = scalar_lea.vmem %s6, %s892
        // Predicated region
        $region113: #{tpu_custom_call.1} parent=35 // pred_check
          %p894 = pneg %p158
        $region114: #{tpu_custom_call.1} parent=35 // pred_check_branch
          %896 = sbr.rel (%p894) target = $region116
        $region115: #{tpu_custom_call.1} parent=35 // pred_region
          %s897 = smul.u32 2, %s33
        $region116: #{tpu_custom_call.1} parent=35 // pred_fallthru
          _
      $region36: #{tpu_custom_call.1} parent=5 // pred_fallthru
        _
      %p898 = scmp.le.s32.totalorder 2, %s24
      // Predicated region
      $region117: #{tpu_custom_call.1} parent=5 // pred_check
        %p899 = pneg %p898
      $region118: #{tpu_custom_call.1} parent=5 // pred_check_branch
        %901 = sbr.rel (%p899) target = $region120
      $region119: #{tpu_custom_call.1} parent=5 // pred_region
        %s902 = ssub.s32 %s24, 2
        // Predicated region
        $region121: #{tpu_custom_call.1} parent=119 // pred_check
          %p903 = pneg %p164
        $region122: #{tpu_custom_call.1} parent=119 // pred_check_branch
          %905 = sbr.rel (%p903) target = $region124
        $region123: #{tpu_custom_call.1} parent=119 // pred_region
          %s906 = smul.u32 2, %s35
          %p907 = scmp.lt.s32.totalorder %s906, 3
          %s908 = scalar_select %p907, %s906, 3
          %s909 = smul.addr %s908, 8
          %s910 = scalar_lea.vmem %s6, %s909
        $region124: #{tpu_custom_call.1} parent=119 // pred_fallthru
          _
      $region120: #{tpu_custom_call.1} parent=5 // pred_fallthru
        _
    $region6: #{tpu_custom_call.1} parent=1 // loop_footer
      %s28 = sadd.s32 1, %s24
    $region7: #{tpu_custom_call.1} parent=1 // loop_footer_branch
      %23 = sbr.rel target = $region3
    $region8: #{tpu_custom_call.1} parent=1 // loop_exit
      _
    %911 = vsyncpa [#allocation11], 1
    %s912 = scalar_lea.sflag [#allocation11], 1
    %913 = vsyncpa %s912, 1
  %914 = vsyncmov [#allocation3]
  %s915 = vpop.sfrf %914
  %p916 = scmp.eq.s32.totalorder %s915, 0
  %p917 = pneg %p916
  %919 = shalt.err (%p917)
  %s920 = scalar_lea.sflag [#allocation3], 1
  %921 = vsyncmov %s920
  %s922 = vpop.sfrf %921
  %p923 = scmp.eq.s32.totalorder %s922, 0
  %p924 = pneg %p923
  %926 = shalt.err (%p924)
  %s927 = scalar_lea.sflag [#allocation3], 2
  %928 = vsyncmov %s927
  %s929 = vpop.sfrf %928
  %p930 = scmp.eq.s32.totalorder %s929, 0
  %p931 = pneg %p930
  %933 = shalt.err (%p931)
  %s934 = scalar_lea.sflag [#allocation3], 3
  %935 = vsyncmov %s934
  %s936 = vpop.sfrf %935
  %p937 = scmp.eq.s32.totalorder %s936, 0
  %p938 = pneg %p937
  %940 = shalt.err (%p938)
  %s941 = scalar_lea.sflag [#allocation3], 4
  %942 = vsyncmov %s941
  %s943 = vpop.sfrf %942
  %p944 = scmp.eq.s32.totalorder %s943, 0
  %p945 = pneg %p944
  %947 = shalt.err (%p945)
  %s948 = scalar_lea.sflag [#allocation3], 5
  %949 = vsyncmov %s948
  %s950 = vpop.sfrf %949
  %p951 = scmp.eq.s32.totalorder %s950, 0
  %p952 = pneg %p951
  %954 = shalt.err (%p952)
  %s955 = scalar_lea.sflag [#allocation3], 6
  %956 = vsyncmov %s955
  %s957 = vpop.sfrf %956
  %p958 = scmp.eq.s32.totalorder %s957, 0
  %p959 = pneg %p958
  %961 = shalt.err (%p959)
  %s962 = scalar_lea.sflag [#allocation3], 7
  %963 = vsyncmov %s962
  %s964 = vpop.sfrf %963
  %p965 = scmp.eq.s32.totalorder %s964, 0
  %p966 = pneg %p965
  %968 = shalt.err (%p966)
  %s969 = scalar_lea.sflag [#allocation3], 8
  %970 = vsyncmov %s969
  %s971 = vpop.sfrf %970
  %p972 = scmp.eq.s32.totalorder %s971, 0
  %p973 = pneg %p972
  %975 = shalt.err (%p973)
  %s976 = scalar_lea.sflag [#allocation3], 9
  %977 = vsyncmov %s976
  %s978 = vpop.sfrf %977
  %p979 = scmp.eq.s32.totalorder %s978, 0
  %p980 = pneg %p979
  %982 = shalt.err (%p980)
  %s983 = scalar_lea.sflag [#allocation3], 10
  %984 = vsyncmov %s983
  %s985 = vpop.sfrf %984
  %p986 = scmp.eq.s32.totalorder %s985, 0
  %p987 = pneg %p986
  %989 = shalt.err (%p987)
  %s990 = scalar_lea.sflag [#allocation3], 11
  %991 = vsyncmov %s990
  %s992 = vpop.sfrf %991
  %p993 = scmp.eq.s32.totalorder %s992, 0
  %p994 = pneg %p993
  %996 = shalt.err (%p994)
  %s997 = scalar_lea.sflag [#allocation3], 12
  %998 = vsyncmov %s997
  %s999 = vpop.sfrf %998
  %p1000 = scmp.eq.s32.totalorder %s999, 0
  %p1001 = pneg %p1000
  %1003 = shalt.err (%p1001)
  %s1004 = scalar_lea.sflag [#allocation3], 13
  %1005 = vsyncmov %s1004
  %s1006 = vpop.sfrf %1005
  %p1007 = scmp.eq.s32.totalorder %s1006, 0
  %p1008 = pneg %p1007
  %1010 = shalt.err (%p1008)
  %s1011 = scalar_lea.sflag [#allocation3], 14
  %1012 = vsyncmov %s1011
  %s1013 = vpop.sfrf %1012
  %p1014 = scmp.eq.s32.totalorder %s1013, 0
  %p1015 = pneg %p1014
  %1017 = shalt.err (%p1015)
  %s1018 = scalar_lea.sflag [#allocation3], 15
  %1019 = vsyncmov %s1018
  %s1020 = vpop.sfrf %1019
  %p1021 = scmp.eq.s32.totalorder %s1020, 0
  %p1022 = pneg %p1021
  %1024 = shalt.err (%p1022)

</llo_original>
